<compile_context>
chip_gen: v7x
topology: tpu7x:2x2x1
jax: 0.10.0
libtpu: 0.0.40
codegen_flags: <defaults>
</compile_context>

<pallas_src>
import jax
import jax.numpy as jnp
from jax.experimental import pallas as pl
from jax.experimental.pallas import tpu as pltpu


def _make_rnn_kernel(n_features):
    """Build the fused kernel for a fixed input width (9 * 3**k); the level
    loop is unrolled in Python since the level count is static."""

    def kernel(x_ref, w1c_ref, b1c_ref, w2c_ref, b2c_ref,
               w1e_ref, b1e_ref, w2e_ref, b2e_ref, o_ref, buf):
        # ---- load every weight exactly once (they stay resident) ----
        w1c = w1c_ref[...]; b1c = b1c_ref[...]      # (9, H), (1, H)
        w2c = w2c_ref[...]; b2c = b2c_ref[...]      # (H, 3), (1, 3)
        w1e = w1e_ref[...]; b1e = b1e_ref[...]      # (3, H), (1, H)
        w2e = w2e_ref[...]; b2e = b2e_ref[...]      # (H, 9), (1, 9)

        def dot32(a, b):
            return jnp.dot(a, b, preferred_element_type=jnp.float32)

        def matmul_k3(x, w):
            # (m,3) @ (3,H): a 3-deep contraction wastes a full MXU push/pop;
            # do it as three broadcast-FMAs on the (otherwise idle) VPU.
            return (x[:, 0:1] * w[0:1, :]
                    + x[:, 1:2] * w[1:2, :]
                    + x[:, 2:3] * w[2:3, :])

        def to_chunks(flat, n, c):
            # (1, n*c) -> (n, c): relayout through the VMEM scratch using only
            # static slice stores/loads (no in-kernel reshape/concat).
            if n == 1:
                return flat
            for i in range(n):
                buf[i:i + 1, 0:c] = flat[:, c * i:c * (i + 1)]
            return buf[0:n, 0:c]

        def to_flat(mat, n, c):
            # (n, c) -> (1, n*c): same relayout in the other direction.
            if n == 1:
                return mat
            for i in range(n):
                buf[0:1, c * i:c * (i + 1)] = mat[i:i + 1, :]
            return buf[0:1, 0:n * c]

        flat = x_ref[...]                             # (1, N)
        width = n_features

        # ---------------- compress: 9 -> 3 until width == 3 ----------------
        while width != 3:
            n = width // 9
            xm = to_chunks(flat, n, 9)                # (n, 9)
            h = jnp.maximum(dot32(xm, w1c) + b1c, 0.0)
            y = dot32(h, w2c) + b2c                   # (n, 3)
            flat = to_flat(y, n, 3)                   # (1, 3n)
            width = 3 * n

        # ---------------- expand: 3 -> 9 until width == N -------------------
        while width != n_features:
            m = width // 3
            xm = to_chunks(flat, m, 3)                # (m, 3)
            h = jnp.maximum(matmul_k3(xm, w1e) + b1e, 0.0)
            y = dot32(h, w2e) + b2e                   # (m, 9)
            width = 9 * m
            if width == n_features:
                # Final level: scatter rows straight into the single (1, N)
                # output slab -- no extra scratch round-trip.
                if m == 1:
                    o_ref[...] = y
                else:
                    for i in range(m):
                        o_ref[0:1, 9 * i:9 * (i + 1)] = y[i:i + 1, :]
            else:
                flat = to_flat(y, m, 9)               # (1, 9m)

    return kernel


def rnn_forward(x, params):
    """Fused single-kernel Pallas implementation of RNN.forward."""
    assert x.ndim == 2 and x.shape[0] == 1, "reference module requires batch=1"
    n_features = x.shape[1]
    w = n_features
    while w > 9 and w % 3 == 0:
        w //= 3
    assert w == 9, "input width must be 9 * 3**k"

    w1c, b1c = params["i2h1"]
    w2c, b2c = params["h12c"]
    w1e, b1e = params["c2h2"]
    w2e, b2e = params["h22o"]
    hidden = w1c.shape[1]

    # Advisory cost estimate so XLA knows this custom call is tiny.
    flops = 0
    width = n_features
    while width != 3:
        n = width // 9
        flops += 2 * n * (9 * hidden + hidden * 3)
        width = 3 * n
    while width != n_features:
        m = width // 3
        flops += 2 * m * (3 * hidden + hidden * 9)
        width = 9 * m

    operands = (x, w1c, b1c, w2c, b2c, w1e, b1e, w2e, b2e)
    bytes_accessed = (sum(int(a.size) for a in operands) + n_features) * 4

    vmem = pl.BlockSpec(memory_space=pltpu.MemorySpace.VMEM)
    scratch_rows = max(8, n_features // 9)
    scratch_cols = max(128, n_features)

    return pl.pallas_call(
        _make_rnn_kernel(n_features),
        out_shape=jax.ShapeDtypeStruct((1, n_features), jnp.float32),
        in_specs=[vmem] * len(operands),
        out_specs=vmem,
        scratch_shapes=[pltpu.VMEM((scratch_rows, scratch_cols), jnp.float32)],
        cost_estimate=pl.CostEstimate(flops=flops, transcendentals=0,
                                      bytes_accessed=bytes_accessed),
    )(*operands)


def init_params(key, hidden=32):
    """Deterministic synthetic parameters (shapes follow RNN.__init__)."""
    ks = jax.random.split(key, 8)

    def lin(kw, kb, din, dout):
        w = jax.random.normal(kw, (din, dout), jnp.float32) / jnp.sqrt(
            jnp.float32(din))
        b = 0.01 * jax.random.normal(kb, (1, dout), jnp.float32)
        return w, b

    w_i2h1, b_i2h1 = lin(ks[0], ks[1], 9, hidden)      # nn.Linear(9, H)
    w_h12c, b_h12c = lin(ks[2], ks[3], hidden, 3)      # nn.Linear(H, 3)
    w_c2h2, b_c2h2 = lin(ks[4], ks[5], 3, hidden)      # nn.Linear(3, H)
    w_h22o, b_h22o = lin(ks[6], ks[7], hidden, 9)      # nn.Linear(H, 9)
    return dict(i2h1=(w_i2h1, b_i2h1), h12c=(w_h12c, b_h12c),
                c2h2=(w_c2h2, b_c2h2), h22o=(w_h22o, b_h22o))


def rnn_forward_ref(x, params):
    """Pure-JAX reference (matmul precision pinned to HIGHEST so it compares
    like-with-like against the kernel's f32 accumulation)."""
    def lin(a, w, b):
        return jnp.dot(a, w, precision=jax.lax.Precision.HIGHEST,
                       preferred_element_type=jnp.float32) + b

    out_shape = x.shape
    cur = x
    while cur.shape != (1, 3):
        n = cur.shape[1] // 9
        w1, b1 = params["i2h1"]
        w2, b2 = params["h12c"]
        h = jnp.maximum(lin(cur.reshape(n, 9), w1, b1), 0.0)
        cur = lin(h, w2, b2).reshape(1, n * 3)
    while cur.shape != out_shape:
        m = cur.shape[1] // 3
        w1, b1 = params["c2h2"]
        w2, b2 = params["h22o"]
        h = jnp.maximum(lin(cur.reshape(m, 3), w1, b1), 0.0)
        cur = lin(h, w2, b2).reshape(1, m * 9)
    return cur


if __name__ == "__main__":
    key = jax.random.PRNGKey(0)
    kx, kp = jax.random.split(key)

    # Meta-tic-tac-toe board: 9 sub-boards x 9 cells = 81 features, batch = 1.
    x = jax.random.normal(kx, (1, 81), jnp.float32)
    params = init_params(kp, hidden=32)

    out = jax.block_until_ready(rnn_forward(x, params))
    assert out.shape == x.shape and out.dtype == jnp.float32

    ref = rnn_forward_ref(x, params)
    assert jnp.allclose(out, ref, atol=1e-4, rtol=1e-4), (
        "max abs err = %r" % float(jnp.max(jnp.abs(out - ref))))

    print("KERNEL_OK")
</pallas_src>

<mosaic_0001>
module attributes {stable_mosaic.version = 11 : i64} {
  func.func @kernel(%arg0: memref<1x81xf32, #tpu.memory_space<vmem>>, %arg1: memref<9x32xf32, #tpu.memory_space<vmem>>, %arg2: memref<1x32xf32, #tpu.memory_space<vmem>>, %arg3: memref<32x3xf32, #tpu.memory_space<vmem>>, %arg4: memref<1x3xf32, #tpu.memory_space<vmem>>, %arg5: memref<3x32xf32, #tpu.memory_space<vmem>>, %arg6: memref<1x32xf32, #tpu.memory_space<vmem>>, %arg7: memref<32x9xf32, #tpu.memory_space<vmem>>, %arg8: memref<1x9xf32, #tpu.memory_space<vmem>>, %arg9: memref<1x81xf32, #tpu.memory_space<vmem>>, %arg10: memref<9x128xf32, #tpu.memory_space<vmem>>) attributes {dimension_semantics = [], scalar_prefetch = 0 : i64, scratch_operands = 1 : i64, tpu.core_type = #tpu.core_type<tc>} {
    %c0 = arith.constant 0 : index
    %c0_0 = arith.constant 0 : index
    %0 = vector.load %arg1[%c0, %c0_0] : memref<9x32xf32, #tpu.memory_space<vmem>>, vector<9x32xf32>
    %c0_1 = arith.constant 0 : index
    %c0_2 = arith.constant 0 : index
    %1 = vector.load %arg2[%c0_1, %c0_2] : memref<1x32xf32, #tpu.memory_space<vmem>>, vector<1x32xf32>
    %c0_3 = arith.constant 0 : index
    %c0_4 = arith.constant 0 : index
    %2 = vector.load %arg3[%c0_3, %c0_4] : memref<32x3xf32, #tpu.memory_space<vmem>>, vector<32x3xf32>
    %c0_5 = arith.constant 0 : index
    %c0_6 = arith.constant 0 : index
    %3 = vector.load %arg4[%c0_5, %c0_6] : memref<1x3xf32, #tpu.memory_space<vmem>>, vector<1x3xf32>
    %c0_7 = arith.constant 0 : index
    %c0_8 = arith.constant 0 : index
    %4 = vector.load %arg5[%c0_7, %c0_8] : memref<3x32xf32, #tpu.memory_space<vmem>>, vector<3x32xf32>
    %c0_9 = arith.constant 0 : index
    %c0_10 = arith.constant 0 : index
    %5 = vector.load %arg6[%c0_9, %c0_10] : memref<1x32xf32, #tpu.memory_space<vmem>>, vector<1x32xf32>
    %c0_11 = arith.constant 0 : index
    %c0_12 = arith.constant 0 : index
    %6 = vector.load %arg7[%c0_11, %c0_12] : memref<32x9xf32, #tpu.memory_space<vmem>>, vector<32x9xf32>
    %c0_13 = arith.constant 0 : index
    %c0_14 = arith.constant 0 : index
    %7 = vector.load %arg8[%c0_13, %c0_14] : memref<1x9xf32, #tpu.memory_space<vmem>>, vector<1x9xf32>
    %c0_15 = arith.constant 0 : index
    %c0_16 = arith.constant 0 : index
    %8 = vector.load %arg0[%c0_15, %c0_16] : memref<1x81xf32, #tpu.memory_space<vmem>>, vector<1x81xf32>
    %9 = vector.extract_strided_slice %8 {offsets = [0, 0], sizes = [1, 9], strides = [1, 1]} : vector<1x81xf32> to vector<1x9xf32>
    %c0_17 = arith.constant 0 : index
    %c0_18 = arith.constant 0 : index
    %10 = vector.load %arg10[%c0_17, %c0_18] : memref<9x128xf32, #tpu.memory_space<vmem>>, vector<1x9xf32>
    tpu.vector_store %arg10[%c0_17, %c0_18], %9 {strides = array<i32>} : memref<9x128xf32, #tpu.memory_space<vmem>>, vector<1x9xf32>,
    %11 = vector.extract_strided_slice %8 {offsets = [0, 9], sizes = [1, 9], strides = [1, 1]} : vector<1x81xf32> to vector<1x9xf32>
    %c1 = arith.constant 1 : index
    %c0_19 = arith.constant 0 : index
    %12 = vector.load %arg10[%c1, %c0_19] : memref<9x128xf32, #tpu.memory_space<vmem>>, vector<1x9xf32>
    tpu.vector_store %arg10[%c1, %c0_19], %11 {strides = array<i32>} : memref<9x128xf32, #tpu.memory_space<vmem>>, vector<1x9xf32>,
    %13 = vector.extract_strided_slice %8 {offsets = [0, 18], sizes = [1, 9], strides = [1, 1]} : vector<1x81xf32> to vector<1x9xf32>
    %c2 = arith.constant 2 : index
    %c0_20 = arith.constant 0 : index
    %14 = vector.load %arg10[%c2, %c0_20] : memref<9x128xf32, #tpu.memory_space<vmem>>, vector<1x9xf32>
    tpu.vector_store %arg10[%c2, %c0_20], %13 {strides = array<i32>} : memref<9x128xf32, #tpu.memory_space<vmem>>, vector<1x9xf32>,
    %15 = vector.extract_strided_slice %8 {offsets = [0, 27], sizes = [1, 9], strides = [1, 1]} : vector<1x81xf32> to vector<1x9xf32>
    %c3 = arith.constant 3 : index
    %c0_21 = arith.constant 0 : index
    %16 = vector.load %arg10[%c3, %c0_21] : memref<9x128xf32, #tpu.memory_space<vmem>>, vector<1x9xf32>
    tpu.vector_store %arg10[%c3, %c0_21], %15 {strides = array<i32>} : memref<9x128xf32, #tpu.memory_space<vmem>>, vector<1x9xf32>,
    %17 = vector.extract_strided_slice %8 {offsets = [0, 36], sizes = [1, 9], strides = [1, 1]} : vector<1x81xf32> to vector<1x9xf32>
    %c4 = arith.constant 4 : index
    %c0_22 = arith.constant 0 : index
    %18 = vector.load %arg10[%c4, %c0_22] : memref<9x128xf32, #tpu.memory_space<vmem>>, vector<1x9xf32>
    tpu.vector_store %arg10[%c4, %c0_22], %17 {strides = array<i32>} : memref<9x128xf32, #tpu.memory_space<vmem>>, vector<1x9xf32>,
    %19 = vector.extract_strided_slice %8 {offsets = [0, 45], sizes = [1, 9], strides = [1, 1]} : vector<1x81xf32> to vector<1x9xf32>
    %c5 = arith.constant 5 : index
    %c0_23 = arith.constant 0 : index
    %20 = vector.load %arg10[%c5, %c0_23] : memref<9x128xf32, #tpu.memory_space<vmem>>, vector<1x9xf32>
    tpu.vector_store %arg10[%c5, %c0_23], %19 {strides = array<i32>} : memref<9x128xf32, #tpu.memory_space<vmem>>, vector<1x9xf32>,
    %21 = vector.extract_strided_slice %8 {offsets = [0, 54], sizes = [1, 9], strides = [1, 1]} : vector<1x81xf32> to vector<1x9xf32>
    %c6 = arith.constant 6 : index
    %c0_24 = arith.constant 0 : index
    %22 = vector.load %arg10[%c6, %c0_24] : memref<9x128xf32, #tpu.memory_space<vmem>>, vector<1x9xf32>
    tpu.vector_store %arg10[%c6, %c0_24], %21 {strides = array<i32>} : memref<9x128xf32, #tpu.memory_space<vmem>>, vector<1x9xf32>,
    %23 = vector.extract_strided_slice %8 {offsets = [0, 63], sizes = [1, 9], strides = [1, 1]} : vector<1x81xf32> to vector<1x9xf32>
    %c7 = arith.constant 7 : index
    %c0_25 = arith.constant 0 : index
    %24 = vector.load %arg10[%c7, %c0_25] : memref<9x128xf32, #tpu.memory_space<vmem>>, vector<1x9xf32>
    tpu.vector_store %arg10[%c7, %c0_25], %23 {strides = array<i32>} : memref<9x128xf32, #tpu.memory_space<vmem>>, vector<1x9xf32>,
    %25 = vector.extract_strided_slice %8 {offsets = [0, 72], sizes = [1, 9], strides = [1, 1]} : vector<1x81xf32> to vector<1x9xf32>
    %c8 = arith.constant 8 : index
    %c0_26 = arith.constant 0 : index
    %26 = vector.load %arg10[%c8, %c0_26] : memref<9x128xf32, #tpu.memory_space<vmem>>, vector<1x9xf32>
    tpu.vector_store %arg10[%c8, %c0_26], %25 {strides = array<i32>} : memref<9x128xf32, #tpu.memory_space<vmem>>, vector<1x9xf32>,
    %c0_27 = arith.constant 0 : index
    %c0_28 = arith.constant 0 : index
    %27 = vector.load %arg10[%c0_27, %c0_28] : memref<9x128xf32, #tpu.memory_space<vmem>>, vector<9x9xf32>
    %cst = arith.constant dense<0.000000e+00> : vector<9x32xf32>
    %28 = tpu.matmul %27, %0, %cst {dimension_numbers = #tpu.dot_dimension_numbers<[1], [0], [0], [1], [0, 0, 1, 1], [], []>} : vector<9x9xf32>, vector<9x32xf32>, vector<9x32xf32> -> vector<9x32xf32>
    %29 = vector.broadcast %1 : vector<1x32xf32> to vector<9x32xf32>
    %30 = arith.addf %28, %29 : vector<9x32xf32>
    %cst_29 = arith.constant 0.000000e+00 : f32
    %31 = vector.broadcast %cst_29 : f32 to vector<9x32xf32>
    %32 = arith.maximumf %30, %31 : vector<9x32xf32>
    %cst_30 = arith.constant dense<0.000000e+00> : vector<9x3xf32>
    %33 = tpu.matmul %32, %2, %cst_30 {dimension_numbers = #tpu.dot_dimension_numbers<[1], [0], [0], [1], [0, 0, 1, 1], [], []>} : vector<9x32xf32>, vector<32x3xf32>, vector<9x3xf32> -> vector<9x3xf32>
    %34 = vector.broadcast %3 : vector<1x3xf32> to vector<9x3xf32>
    %35 = arith.addf %33, %34 : vector<9x3xf32>
    %36 = vector.extract_strided_slice %35 {offsets = [0, 0], sizes = [1, 3], strides = [1, 1]} : vector<9x3xf32> to vector<1x3xf32>
    %c0_31 = arith.constant 0 : index
    %c0_32 = arith.constant 0 : index
    %37 = vector.load %arg10[%c0_31, %c0_32] : memref<9x128xf32, #tpu.memory_space<vmem>>, vector<1x3xf32>
    tpu.vector_store %arg10[%c0_31, %c0_32], %36 {strides = array<i32>} : memref<9x128xf32, #tpu.memory_space<vmem>>, vector<1x3xf32>,
    %38 = vector.extract_strided_slice %35 {offsets = [1, 0], sizes = [1, 3], strides = [1, 1]} : vector<9x3xf32> to vector<1x3xf32>
    %c0_33 = arith.constant 0 : index
    %c3_34 = arith.constant 3 : index
    %39 = vector.load %arg10[%c0_33, %c3_34] : memref<9x128xf32, #tpu.memory_space<vmem>>, vector<1x3xf32>
    tpu.vector_store %arg10[%c0_33, %c3_34], %38 {strides = array<i32>} : memref<9x128xf32, #tpu.memory_space<vmem>>, vector<1x3xf32>,
    %40 = vector.extract_strided_slice %35 {offsets = [2, 0], sizes = [1, 3], strides = [1, 1]} : vector<9x3xf32> to vector<1x3xf32>
    %c0_35 = arith.constant 0 : index
    %c6_36 = arith.constant 6 : index
    %41 = vector.load %arg10[%c0_35, %c6_36] : memref<9x128xf32, #tpu.memory_space<vmem>>, vector<1x3xf32>
    tpu.vector_store %arg10[%c0_35, %c6_36], %40 {strides = array<i32>} : memref<9x128xf32, #tpu.memory_space<vmem>>, vector<1x3xf32>,
    %42 = vector.extract_strided_slice %35 {offsets = [3, 0], sizes = [1, 3], strides = [1, 1]} : vector<9x3xf32> to vector<1x3xf32>
    %c0_37 = arith.constant 0 : index
    %c9 = arith.constant 9 : index
    %43 = vector.load %arg10[%c0_37, %c9] : memref<9x128xf32, #tpu.memory_space<vmem>>, vector<1x3xf32>
    tpu.vector_store %arg10[%c0_37, %c9], %42 {strides = array<i32>} : memref<9x128xf32, #tpu.memory_space<vmem>>, vector<1x3xf32>,
    %44 = vector.extract_strided_slice %35 {offsets = [4, 0], sizes = [1, 3], strides = [1, 1]} : vector<9x3xf32> to vector<1x3xf32>
    %c0_38 = arith.constant 0 : index
    %c12 = arith.constant 12 : index
    %45 = vector.load %arg10[%c0_38, %c12] : memref<9x128xf32, #tpu.memory_space<vmem>>, vector<1x3xf32>
    tpu.vector_store %arg10[%c0_38, %c12], %44 {strides = array<i32>} : memref<9x128xf32, #tpu.memory_space<vmem>>, vector<1x3xf32>,
    %46 = vector.extract_strided_slice %35 {offsets = [5, 0], sizes = [1, 3], strides = [1, 1]} : vector<9x3xf32> to vector<1x3xf32>
    %c0_39 = arith.constant 0 : index
    %c15 = arith.constant 15 : index
    %47 = vector.load %arg10[%c0_39, %c15] : memref<9x128xf32, #tpu.memory_space<vmem>>, vector<1x3xf32>
    tpu.vector_store %arg10[%c0_39, %c15], %46 {strides = array<i32>} : memref<9x128xf32, #tpu.memory_space<vmem>>, vector<1x3xf32>,
    %48 = vector.extract_strided_slice %35 {offsets = [6, 0], sizes = [1, 3], strides = [1, 1]} : vector<9x3xf32> to vector<1x3xf32>
    %c0_40 = arith.constant 0 : index
    %c18 = arith.constant 18 : index
    %49 = vector.load %arg10[%c0_40, %c18] : memref<9x128xf32, #tpu.memory_space<vmem>>, vector<1x3xf32>
    tpu.vector_store %arg10[%c0_40, %c18], %48 {strides = array<i32>} : memref<9x128xf32, #tpu.memory_space<vmem>>, vector<1x3xf32>,
    %50 = vector.extract_strided_slice %35 {offsets = [7, 0], sizes = [1, 3], strides = [1, 1]} : vector<9x3xf32> to vector<1x3xf32>
    %c0_41 = arith.constant 0 : index
    %c21 = arith.constant 21 : index
    %51 = vector.load %arg10[%c0_41, %c21] : memref<9x128xf32, #tpu.memory_space<vmem>>, vector<1x3xf32>
    tpu.vector_store %arg10[%c0_41, %c21], %50 {strides = array<i32>} : memref<9x128xf32, #tpu.memory_space<vmem>>, vector<1x3xf32>,
    %52 = vector.extract_strided_slice %35 {offsets = [8, 0], sizes = [1, 3], strides = [1, 1]} : vector<9x3xf32> to vector<1x3xf32>
    %c0_42 = arith.constant 0 : index
    %c24 = arith.constant 24 : index
    %53 = vector.load %arg10[%c0_42, %c24] : memref<9x128xf32, #tpu.memory_space<vmem>>, vector<1x3xf32>
    tpu.vector_store %arg10[%c0_42, %c24], %52 {strides = array<i32>} : memref<9x128xf32, #tpu.memory_space<vmem>>, vector<1x3xf32>,
    %c0_43 = arith.constant 0 : index
    %c0_44 = arith.constant 0 : index
    %54 = vector.load %arg10[%c0_43, %c0_44] : memref<9x128xf32, #tpu.memory_space<vmem>>, vector<1x27xf32>
    %55 = vector.extract_strided_slice %54 {offsets = [0, 0], sizes = [1, 9], strides = [1, 1]} : vector<1x27xf32> to vector<1x9xf32>
    %c0_45 = arith.constant 0 : index
    %c0_46 = arith.constant 0 : index
    %56 = vector.load %arg10[%c0_45, %c0_46] : memref<9x128xf32, #tpu.memory_space<vmem>>, vector<1x9xf32>
    tpu.vector_store %arg10[%c0_45, %c0_46], %55 {strides = array<i32>} : memref<9x128xf32, #tpu.memory_space<vmem>>, vector<1x9xf32>,
    %57 = vector.extract_strided_slice %54 {offsets = [0, 9], sizes = [1, 9], strides = [1, 1]} : vector<1x27xf32> to vector<1x9xf32>
    %c1_47 = arith.constant 1 : index
    %c0_48 = arith.constant 0 : index
    %58 = vector.load %arg10[%c1_47, %c0_48] : memref<9x128xf32, #tpu.memory_space<vmem>>, vector<1x9xf32>
    tpu.vector_store %arg10[%c1_47, %c0_48], %57 {strides = array<i32>} : memref<9x128xf32, #tpu.memory_space<vmem>>, vector<1x9xf32>,
    %59 = vector.extract_strided_slice %54 {offsets = [0, 18], sizes = [1, 9], strides = [1, 1]} : vector<1x27xf32> to vector<1x9xf32>
    %c2_49 = arith.constant 2 : index
    %c0_50 = arith.constant 0 : index
    %60 = vector.load %arg10[%c2_49, %c0_50] : memref<9x128xf32, #tpu.memory_space<vmem>>, vector<1x9xf32>
    tpu.vector_store %arg10[%c2_49, %c0_50], %59 {strides = array<i32>} : memref<9x128xf32, #tpu.memory_space<vmem>>, vector<1x9xf32>,
    %c0_51 = arith.constant 0 : index
    %c0_52 = arith.constant 0 : index
    %61 = vector.load %arg10[%c0_51, %c0_52] : memref<9x128xf32, #tpu.memory_space<vmem>>, vector<3x9xf32>
    %cst_53 = arith.constant dense<0.000000e+00> : vector<3x32xf32>
    %62 = tpu.matmul %61, %0, %cst_53 {dimension_numbers = #tpu.dot_dimension_numbers<[1], [0], [0], [1], [0, 0, 1, 1], [], []>} : vector<3x9xf32>, vector<9x32xf32>, vector<3x32xf32> -> vector<3x32xf32>
    %63 = vector.broadcast %1 : vector<1x32xf32> to vector<3x32xf32>
    %64 = arith.addf %62, %63 : vector<3x32xf32>
    %cst_54 = arith.constant 0.000000e+00 : f32
    %65 = vector.broadcast %cst_54 : f32 to vector<3x32xf32>
    %66 = arith.maximumf %64, %65 : vector<3x32xf32>
    %cst_55 = arith.constant dense<0.000000e+00> : vector<3x3xf32>
    %67 = tpu.matmul %66, %2, %cst_55 {dimension_numbers = #tpu.dot_dimension_numbers<[1], [0], [0], [1], [0, 0, 1, 1], [], []>} : vector<3x32xf32>, vector<32x3xf32>, vector<3x3xf32> -> vector<3x3xf32>
    %68 = vector.broadcast %3 : vector<1x3xf32> to vector<3x3xf32>
    %69 = arith.addf %67, %68 : vector<3x3xf32>
    %70 = vector.extract_strided_slice %69 {offsets = [0, 0], sizes = [1, 3], strides = [1, 1]} : vector<3x3xf32> to vector<1x3xf32>
    %c0_56 = arith.constant 0 : index
    %c0_57 = arith.constant 0 : index
    %71 = vector.load %arg10[%c0_56, %c0_57] : memref<9x128xf32, #tpu.memory_space<vmem>>, vector<1x3xf32>
    tpu.vector_store %arg10[%c0_56, %c0_57], %70 {strides = array<i32>} : memref<9x128xf32, #tpu.memory_space<vmem>>, vector<1x3xf32>,
    %72 = vector.extract_strided_slice %69 {offsets = [1, 0], sizes = [1, 3], strides = [1, 1]} : vector<3x3xf32> to vector<1x3xf32>
    %c0_58 = arith.constant 0 : index
    %c3_59 = arith.constant 3 : index
    %73 = vector.load %arg10[%c0_58, %c3_59] : memref<9x128xf32, #tpu.memory_space<vmem>>, vector<1x3xf32>
    tpu.vector_store %arg10[%c0_58, %c3_59], %72 {strides = array<i32>} : memref<9x128xf32, #tpu.memory_space<vmem>>, vector<1x3xf32>,
    %74 = vector.extract_strided_slice %69 {offsets = [2, 0], sizes = [1, 3], strides = [1, 1]} : vector<3x3xf32> to vector<1x3xf32>
    %c0_60 = arith.constant 0 : index
    %c6_61 = arith.constant 6 : index
    %75 = vector.load %arg10[%c0_60, %c6_61] : memref<9x128xf32, #tpu.memory_space<vmem>>, vector<1x3xf32>
    tpu.vector_store %arg10[%c0_60, %c6_61], %74 {strides = array<i32>} : memref<9x128xf32, #tpu.memory_space<vmem>>, vector<1x3xf32>,
    %c0_62 = arith.constant 0 : index
    %c0_63 = arith.constant 0 : index
    %76 = vector.load %arg10[%c0_62, %c0_63] : memref<9x128xf32, #tpu.memory_space<vmem>>, vector<1x9xf32>
    %cst_64 = arith.constant dense<0.000000e+00> : vector<1x32xf32>
    %77 = tpu.matmul %76, %0, %cst_64 {dimension_numbers = #tpu.dot_dimension_numbers<[1], [0], [0], [1], [0, 0, 1, 1], [], []>} : vector<1x9xf32>, vector<9x32xf32>, vector<1x32xf32> -> vector<1x32xf32>
    %78 = arith.addf %77, %1 : vector<1x32xf32>
    %cst_65 = arith.constant 0.000000e+00 : f32
    %79 = vector.broadcast %cst_65 : f32 to vector<1x32xf32>
    %80 = arith.maximumf %78, %79 : vector<1x32xf32>
    %cst_66 = arith.constant dense<0.000000e+00> : vector<1x3xf32>
    %81 = tpu.matmul %80, %2, %cst_66 {dimension_numbers = #tpu.dot_dimension_numbers<[1], [0], [0], [1], [0, 0, 1, 1], [], []>} : vector<1x32xf32>, vector<32x3xf32>, vector<1x3xf32> -> vector<1x3xf32>
    %82 = arith.addf %81, %3 : vector<1x3xf32>
    %83 = vector.extract_strided_slice %82 {offsets = [0, 0], sizes = [1, 1], strides = [1, 1]} : vector<1x3xf32> to vector<1x1xf32>
    %84 = vector.extract_strided_slice %4 {offsets = [0, 0], sizes = [1, 32], strides = [1, 1]} : vector<3x32xf32> to vector<1x32xf32>
    %85 = vector.broadcast %83 : vector<1x1xf32> to vector<1x32xf32>
    %86 = arith.mulf %85, %84 : vector<1x32xf32>
    %87 = vector.extract_strided_slice %82 {offsets = [0, 1], sizes = [1, 1], strides = [1, 1]} : vector<1x3xf32> to vector<1x1xf32>
    %88 = vector.extract_strided_slice %4 {offsets = [1, 0], sizes = [1, 32], strides = [1, 1]} : vector<3x32xf32> to vector<1x32xf32>
    %89 = vector.broadcast %87 : vector<1x1xf32> to vector<1x32xf32>
    %90 = arith.mulf %89, %88 : vector<1x32xf32>
    %91 = arith.addf %86, %90 : vector<1x32xf32>
    %92 = vector.extract_strided_slice %82 {offsets = [0, 2], sizes = [1, 1], strides = [1, 1]} : vector<1x3xf32> to vector<1x1xf32>
    %93 = vector.extract_strided_slice %4 {offsets = [2, 0], sizes = [1, 32], strides = [1, 1]} : vector<3x32xf32> to vector<1x32xf32>
    %94 = vector.broadcast %92 : vector<1x1xf32> to vector<1x32xf32>
    %95 = arith.mulf %94, %93 : vector<1x32xf32>
    %96 = arith.addf %91, %95 : vector<1x32xf32>
    %97 = arith.addf %96, %5 : vector<1x32xf32>
    %cst_67 = arith.constant 0.000000e+00 : f32
    %98 = vector.broadcast %cst_67 : f32 to vector<1x32xf32>
    %99 = arith.maximumf %97, %98 : vector<1x32xf32>
    %cst_68 = arith.constant dense<0.000000e+00> : vector<1x9xf32>
    %100 = tpu.matmul %99, %6, %cst_68 {dimension_numbers = #tpu.dot_dimension_numbers<[1], [0], [0], [1], [0, 0, 1, 1], [], []>} : vector<1x32xf32>, vector<32x9xf32>, vector<1x9xf32> -> vector<1x9xf32>
    %101 = arith.addf %100, %7 : vector<1x9xf32>
    %102 = vector.extract_strided_slice %101 {offsets = [0, 0], sizes = [1, 3], strides = [1, 1]} : vector<1x9xf32> to vector<1x3xf32>
    %c0_69 = arith.constant 0 : index
    %c0_70 = arith.constant 0 : index
    %103 = vector.load %arg10[%c0_69, %c0_70] : memref<9x128xf32, #tpu.memory_space<vmem>>, vector<1x3xf32>
    tpu.vector_store %arg10[%c0_69, %c0_70], %102 {strides = array<i32>} : memref<9x128xf32, #tpu.memory_space<vmem>>, vector<1x3xf32>,
    %104 = vector.extract_strided_slice %101 {offsets = [0, 3], sizes = [1, 3], strides = [1, 1]} : vector<1x9xf32> to vector<1x3xf32>
    %c1_71 = arith.constant 1 : index
    %c0_72 = arith.constant 0 : index
    %105 = vector.load %arg10[%c1_71, %c0_72] : memref<9x128xf32, #tpu.memory_space<vmem>>, vector<1x3xf32>
    tpu.vector_store %arg10[%c1_71, %c0_72], %104 {strides = array<i32>} : memref<9x128xf32, #tpu.memory_space<vmem>>, vector<1x3xf32>,
    %106 = vector.extract_strided_slice %101 {offsets = [0, 6], sizes = [1, 3], strides = [1, 1]} : vector<1x9xf32> to vector<1x3xf32>
    %c2_73 = arith.constant 2 : index
    %c0_74 = arith.constant 0 : index
    %107 = vector.load %arg10[%c2_73, %c0_74] : memref<9x128xf32, #tpu.memory_space<vmem>>, vector<1x3xf32>
    tpu.vector_store %arg10[%c2_73, %c0_74], %106 {strides = array<i32>} : memref<9x128xf32, #tpu.memory_space<vmem>>, vector<1x3xf32>,
    %c0_75 = arith.constant 0 : index
    %c0_76 = arith.constant 0 : index
    %108 = vector.load %arg10[%c0_75, %c0_76] : memref<9x128xf32, #tpu.memory_space<vmem>>, vector<3x3xf32>
    %109 = vector.extract_strided_slice %108 {offsets = [0, 0], sizes = [3, 1], strides = [1, 1]} : vector<3x3xf32> to vector<3x1xf32>
    %110 = vector.extract_strided_slice %4 {offsets = [0, 0], sizes = [1, 32], strides = [1, 1]} : vector<3x32xf32> to vector<1x32xf32>
    %111 = vector.broadcast %109 : vector<3x1xf32> to vector<3x32xf32>
    %112 = vector.broadcast %110 : vector<1x32xf32> to vector<3x32xf32>
    %113 = arith.mulf %111, %112 : vector<3x32xf32>
    %114 = vector.extract_strided_slice %108 {offsets = [0, 1], sizes = [3, 1], strides = [1, 1]} : vector<3x3xf32> to vector<3x1xf32>
    %115 = vector.extract_strided_slice %4 {offsets = [1, 0], sizes = [1, 32], strides = [1, 1]} : vector<3x32xf32> to vector<1x32xf32>
    %116 = vector.broadcast %114 : vector<3x1xf32> to vector<3x32xf32>
    %117 = vector.broadcast %115 : vector<1x32xf32> to vector<3x32xf32>
    %118 = arith.mulf %116, %117 : vector<3x32xf32>
    %119 = arith.addf %113, %118 : vector<3x32xf32>
    %120 = vector.extract_strided_slice %108 {offsets = [0, 2], sizes = [3, 1], strides = [1, 1]} : vector<3x3xf32> to vector<3x1xf32>
    %121 = vector.extract_strided_slice %4 {offsets = [2, 0], sizes = [1, 32], strides = [1, 1]} : vector<3x32xf32> to vector<1x32xf32>
    %122 = vector.broadcast %120 : vector<3x1xf32> to vector<3x32xf32>
    %123 = vector.broadcast %121 : vector<1x32xf32> to vector<3x32xf32>
    %124 = arith.mulf %122, %123 : vector<3x32xf32>
    %125 = arith.addf %119, %124 : vector<3x32xf32>
    %126 = vector.broadcast %5 : vector<1x32xf32> to vector<3x32xf32>
    %127 = arith.addf %125, %126 : vector<3x32xf32>
    %cst_77 = arith.constant 0.000000e+00 : f32
    %128 = vector.broadcast %cst_77 : f32 to vector<3x32xf32>
    %129 = arith.maximumf %127, %128 : vector<3x32xf32>
    %cst_78 = arith.constant dense<0.000000e+00> : vector<3x9xf32>
    %130 = tpu.matmul %129, %6, %cst_78 {dimension_numbers = #tpu.dot_dimension_numbers<[1], [0], [0], [1], [0, 0, 1, 1], [], []>} : vector<3x32xf32>, vector<32x9xf32>, vector<3x9xf32> -> vector<3x9xf32>
    %131 = vector.broadcast %7 : vector<1x9xf32> to vector<3x9xf32>
    %132 = arith.addf %130, %131 : vector<3x9xf32>
    %133 = vector.extract_strided_slice %132 {offsets = [0, 0], sizes = [1, 9], strides = [1, 1]} : vector<3x9xf32> to vector<1x9xf32>
    %c0_79 = arith.constant 0 : index
    %c0_80 = arith.constant 0 : index
    %134 = vector.load %arg10[%c0_79, %c0_80] : memref<9x128xf32, #tpu.memory_space<vmem>>, vector<1x9xf32>
    tpu.vector_store %arg10[%c0_79, %c0_80], %133 {strides = array<i32>} : memref<9x128xf32, #tpu.memory_space<vmem>>, vector<1x9xf32>,
    %135 = vector.extract_strided_slice %132 {offsets = [1, 0], sizes = [1, 9], strides = [1, 1]} : vector<3x9xf32> to vector<1x9xf32>
    %c0_81 = arith.constant 0 : index
    %c9_82 = arith.constant 9 : index
    %136 = vector.load %arg10[%c0_81, %c9_82] : memref<9x128xf32, #tpu.memory_space<vmem>>, vector<1x9xf32>
    tpu.vector_store %arg10[%c0_81, %c9_82], %135 {strides = array<i32>} : memref<9x128xf32, #tpu.memory_space<vmem>>, vector<1x9xf32>,
    %137 = vector.extract_strided_slice %132 {offsets = [2, 0], sizes = [1, 9], strides = [1, 1]} : vector<3x9xf32> to vector<1x9xf32>
    %c0_83 = arith.constant 0 : index
    %c18_84 = arith.constant 18 : index
    %138 = vector.load %arg10[%c0_83, %c18_84] : memref<9x128xf32, #tpu.memory_space<vmem>>, vector<1x9xf32>
    tpu.vector_store %arg10[%c0_83, %c18_84], %137 {strides = array<i32>} : memref<9x128xf32, #tpu.memory_space<vmem>>, vector<1x9xf32>,
    %c0_85 = arith.constant 0 : index
    %c0_86 = arith.constant 0 : index
    %139 = vector.load %arg10[%c0_85, %c0_86] : memref<9x128xf32, #tpu.memory_space<vmem>>, vector<1x27xf32>
    %140 = vector.extract_strided_slice %139 {offsets = [0, 0], sizes = [1, 3], strides = [1, 1]} : vector<1x27xf32> to vector<1x3xf32>
    %c0_87 = arith.constant 0 : index
    %c0_88 = arith.constant 0 : index
    %141 = vector.load %arg10[%c0_87, %c0_88] : memref<9x128xf32, #tpu.memory_space<vmem>>, vector<1x3xf32>
    tpu.vector_store %arg10[%c0_87, %c0_88], %140 {strides = array<i32>} : memref<9x128xf32, #tpu.memory_space<vmem>>, vector<1x3xf32>,
    %142 = vector.extract_strided_slice %139 {offsets = [0, 3], sizes = [1, 3], strides = [1, 1]} : vector<1x27xf32> to vector<1x3xf32>
    %c1_89 = arith.constant 1 : index
    %c0_90 = arith.constant 0 : index
    %143 = vector.load %arg10[%c1_89, %c0_90] : memref<9x128xf32, #tpu.memory_space<vmem>>, vector<1x3xf32>
    tpu.vector_store %arg10[%c1_89, %c0_90], %142 {strides = array<i32>} : memref<9x128xf32, #tpu.memory_space<vmem>>, vector<1x3xf32>,
    %144 = vector.extract_strided_slice %139 {offsets = [0, 6], sizes = [1, 3], strides = [1, 1]} : vector<1x27xf32> to vector<1x3xf32>
    %c2_91 = arith.constant 2 : index
    %c0_92 = arith.constant 0 : index
    %145 = vector.load %arg10[%c2_91, %c0_92] : memref<9x128xf32, #tpu.memory_space<vmem>>, vector<1x3xf32>
    tpu.vector_store %arg10[%c2_91, %c0_92], %144 {strides = array<i32>} : memref<9x128xf32, #tpu.memory_space<vmem>>, vector<1x3xf32>,
    %146 = vector.extract_strided_slice %139 {offsets = [0, 9], sizes = [1, 3], strides = [1, 1]} : vector<1x27xf32> to vector<1x3xf32>
    %c3_93 = arith.constant 3 : index
    %c0_94 = arith.constant 0 : index
    %147 = vector.load %arg10[%c3_93, %c0_94] : memref<9x128xf32, #tpu.memory_space<vmem>>, vector<1x3xf32>
    tpu.vector_store %arg10[%c3_93, %c0_94], %146 {strides = array<i32>} : memref<9x128xf32, #tpu.memory_space<vmem>>, vector<1x3xf32>,
    %148 = vector.extract_strided_slice %139 {offsets = [0, 12], sizes = [1, 3], strides = [1, 1]} : vector<1x27xf32> to vector<1x3xf32>
    %c4_95 = arith.constant 4 : index
    %c0_96 = arith.constant 0 : index
    %149 = vector.load %arg10[%c4_95, %c0_96] : memref<9x128xf32, #tpu.memory_space<vmem>>, vector<1x3xf32>
    tpu.vector_store %arg10[%c4_95, %c0_96], %148 {strides = array<i32>} : memref<9x128xf32, #tpu.memory_space<vmem>>, vector<1x3xf32>,
    %150 = vector.extract_strided_slice %139 {offsets = [0, 15], sizes = [1, 3], strides = [1, 1]} : vector<1x27xf32> to vector<1x3xf32>
    %c5_97 = arith.constant 5 : index
    %c0_98 = arith.constant 0 : index
    %151 = vector.load %arg10[%c5_97, %c0_98] : memref<9x128xf32, #tpu.memory_space<vmem>>, vector<1x3xf32>
    tpu.vector_store %arg10[%c5_97, %c0_98], %150 {strides = array<i32>} : memref<9x128xf32, #tpu.memory_space<vmem>>, vector<1x3xf32>,
    %152 = vector.extract_strided_slice %139 {offsets = [0, 18], sizes = [1, 3], strides = [1, 1]} : vector<1x27xf32> to vector<1x3xf32>
    %c6_99 = arith.constant 6 : index
    %c0_100 = arith.constant 0 : index
    %153 = vector.load %arg10[%c6_99, %c0_100] : memref<9x128xf32, #tpu.memory_space<vmem>>, vector<1x3xf32>
    tpu.vector_store %arg10[%c6_99, %c0_100], %152 {strides = array<i32>} : memref<9x128xf32, #tpu.memory_space<vmem>>, vector<1x3xf32>,
    %154 = vector.extract_strided_slice %139 {offsets = [0, 21], sizes = [1, 3], strides = [1, 1]} : vector<1x27xf32> to vector<1x3xf32>
    %c7_101 = arith.constant 7 : index
    %c0_102 = arith.constant 0 : index
    %155 = vector.load %arg10[%c7_101, %c0_102] : memref<9x128xf32, #tpu.memory_space<vmem>>, vector<1x3xf32>
    tpu.vector_store %arg10[%c7_101, %c0_102], %154 {strides = array<i32>} : memref<9x128xf32, #tpu.memory_space<vmem>>, vector<1x3xf32>,
    %156 = vector.extract_strided_slice %139 {offsets = [0, 24], sizes = [1, 3], strides = [1, 1]} : vector<1x27xf32> to vector<1x3xf32>
    %c8_103 = arith.constant 8 : index
    %c0_104 = arith.constant 0 : index
    %157 = vector.load %arg10[%c8_103, %c0_104] : memref<9x128xf32, #tpu.memory_space<vmem>>, vector<1x3xf32>
    tpu.vector_store %arg10[%c8_103, %c0_104], %156 {strides = array<i32>} : memref<9x128xf32, #tpu.memory_space<vmem>>, vector<1x3xf32>,
    %c0_105 = arith.constant 0 : index
    %c0_106 = arith.constant 0 : index
    %158 = vector.load %arg10[%c0_105, %c0_106] : memref<9x128xf32, #tpu.memory_space<vmem>>, vector<9x3xf32>
    %159 = vector.extract_strided_slice %158 {offsets = [0, 0], sizes = [9, 1], strides = [1, 1]} : vector<9x3xf32> to vector<9x1xf32>
    %160 = vector.extract_strided_slice %4 {offsets = [0, 0], sizes = [1, 32], strides = [1, 1]} : vector<3x32xf32> to vector<1x32xf32>
    %161 = vector.broadcast %159 : vector<9x1xf32> to vector<9x32xf32>
    %162 = vector.broadcast %160 : vector<1x32xf32> to vector<9x32xf32>
    %163 = arith.mulf %161, %162 : vector<9x32xf32>
    %164 = vector.extract_strided_slice %158 {offsets = [0, 1], sizes = [9, 1], strides = [1, 1]} : vector<9x3xf32> to vector<9x1xf32>
    %165 = vector.extract_strided_slice %4 {offsets = [1, 0], sizes = [1, 32], strides = [1, 1]} : vector<3x32xf32> to vector<1x32xf32>
    %166 = vector.broadcast %164 : vector<9x1xf32> to vector<9x32xf32>
    %167 = vector.broadcast %165 : vector<1x32xf32> to vector<9x32xf32>
    %168 = arith.mulf %166, %167 : vector<9x32xf32>
    %169 = arith.addf %163, %168 : vector<9x32xf32>
    %170 = vector.extract_strided_slice %158 {offsets = [0, 2], sizes = [9, 1], strides = [1, 1]} : vector<9x3xf32> to vector<9x1xf32>
    %171 = vector.extract_strided_slice %4 {offsets = [2, 0], sizes = [1, 32], strides = [1, 1]} : vector<3x32xf32> to vector<1x32xf32>
    %172 = vector.broadcast %170 : vector<9x1xf32> to vector<9x32xf32>
    %173 = vector.broadcast %171 : vector<1x32xf32> to vector<9x32xf32>
    %174 = arith.mulf %172, %173 : vector<9x32xf32>
    %175 = arith.addf %169, %174 : vector<9x32xf32>
    %176 = vector.broadcast %5 : vector<1x32xf32> to vector<9x32xf32>
    %177 = arith.addf %175, %176 : vector<9x32xf32>
    %cst_107 = arith.constant 0.000000e+00 : f32
    %178 = vector.broadcast %cst_107 : f32 to vector<9x32xf32>
    %179 = arith.maximumf %177, %178 : vector<9x32xf32>
    %cst_108 = arith.constant dense<0.000000e+00> : vector<9x9xf32>
    %180 = tpu.matmul %179, %6, %cst_108 {dimension_numbers = #tpu.dot_dimension_numbers<[1], [0], [0], [1], [0, 0, 1, 1], [], []>} : vector<9x32xf32>, vector<32x9xf32>, vector<9x9xf32> -> vector<9x9xf32>
    %181 = vector.broadcast %7 : vector<1x9xf32> to vector<9x9xf32>
    %182 = arith.addf %180, %181 : vector<9x9xf32>
    %183 = vector.extract_strided_slice %182 {offsets = [0, 0], sizes = [1, 9], strides = [1, 1]} : vector<9x9xf32> to vector<1x9xf32>
    %c0_109 = arith.constant 0 : index
    %c0_110 = arith.constant 0 : index
    %184 = vector.load %arg9[%c0_109, %c0_110] : memref<1x81xf32, #tpu.memory_space<vmem>>, vector<1x9xf32>
    tpu.vector_store %arg9[%c0_109, %c0_110], %183 {strides = array<i32>} : memref<1x81xf32, #tpu.memory_space<vmem>>, vector<1x9xf32>,
    %185 = vector.extract_strided_slice %182 {offsets = [1, 0], sizes = [1, 9], strides = [1, 1]} : vector<9x9xf32> to vector<1x9xf32>
    %c0_111 = arith.constant 0 : index
    %c9_112 = arith.constant 9 : index
    %186 = vector.load %arg9[%c0_111, %c9_112] : memref<1x81xf32, #tpu.memory_space<vmem>>, vector<1x9xf32>
    tpu.vector_store %arg9[%c0_111, %c9_112], %185 {strides = array<i32>} : memref<1x81xf32, #tpu.memory_space<vmem>>, vector<1x9xf32>,
    %187 = vector.extract_strided_slice %182 {offsets = [2, 0], sizes = [1, 9], strides = [1, 1]} : vector<9x9xf32> to vector<1x9xf32>
    %c0_113 = arith.constant 0 : index
    %c18_114 = arith.constant 18 : index
    %188 = vector.load %arg9[%c0_113, %c18_114] : memref<1x81xf32, #tpu.memory_space<vmem>>, vector<1x9xf32>
    tpu.vector_store %arg9[%c0_113, %c18_114], %187 {strides = array<i32>} : memref<1x81xf32, #tpu.memory_space<vmem>>, vector<1x9xf32>,
    %189 = vector.extract_strided_slice %182 {offsets = [3, 0], sizes = [1, 9], strides = [1, 1]} : vector<9x9xf32> to vector<1x9xf32>
    %c0_115 = arith.constant 0 : index
    %c27 = arith.constant 27 : index
    %190 = vector.load %arg9[%c0_115, %c27] : memref<1x81xf32, #tpu.memory_space<vmem>>, vector<1x9xf32>
    tpu.vector_store %arg9[%c0_115, %c27], %189 {strides = array<i32>} : memref<1x81xf32, #tpu.memory_space<vmem>>, vector<1x9xf32>,
    %191 = vector.extract_strided_slice %182 {offsets = [4, 0], sizes = [1, 9], strides = [1, 1]} : vector<9x9xf32> to vector<1x9xf32>
    %c0_116 = arith.constant 0 : index
    %c36 = arith.constant 36 : index
    %192 = vector.load %arg9[%c0_116, %c36] : memref<1x81xf32, #tpu.memory_space<vmem>>, vector<1x9xf32>
    tpu.vector_store %arg9[%c0_116, %c36], %191 {strides = array<i32>} : memref<1x81xf32, #tpu.memory_space<vmem>>, vector<1x9xf32>,
    %193 = vector.extract_strided_slice %182 {offsets = [5, 0], sizes = [1, 9], strides = [1, 1]} : vector<9x9xf32> to vector<1x9xf32>
    %c0_117 = arith.constant 0 : index
    %c45 = arith.constant 45 : index
    %194 = vector.load %arg9[%c0_117, %c45] : memref<1x81xf32, #tpu.memory_space<vmem>>, vector<1x9xf32>
    tpu.vector_store %arg9[%c0_117, %c45], %193 {strides = array<i32>} : memref<1x81xf32, #tpu.memory_space<vmem>>, vector<1x9xf32>,
    %195 = vector.extract_strided_slice %182 {offsets = [6, 0], sizes = [1, 9], strides = [1, 1]} : vector<9x9xf32> to vector<1x9xf32>
    %c0_118 = arith.constant 0 : index
    %c54 = arith.constant 54 : index
    %196 = vector.load %arg9[%c0_118, %c54] : memref<1x81xf32, #tpu.memory_space<vmem>>, vector<1x9xf32>
    tpu.vector_store %arg9[%c0_118, %c54], %195 {strides = array<i32>} : memref<1x81xf32, #tpu.memory_space<vmem>>, vector<1x9xf32>,
    %197 = vector.extract_strided_slice %182 {offsets = [7, 0], sizes = [1, 9], strides = [1, 1]} : vector<9x9xf32> to vector<1x9xf32>
    %c0_119 = arith.constant 0 : index
    %c63 = arith.constant 63 : index
    %198 = vector.load %arg9[%c0_119, %c63] : memref<1x81xf32, #tpu.memory_space<vmem>>, vector<1x9xf32>
    tpu.vector_store %arg9[%c0_119, %c63], %197 {strides = array<i32>} : memref<1x81xf32, #tpu.memory_space<vmem>>, vector<1x9xf32>,
    %199 = vector.extract_strided_slice %182 {offsets = [8, 0], sizes = [1, 9], strides = [1, 1]} : vector<9x9xf32> to vector<1x9xf32>
    %c0_120 = arith.constant 0 : index
    %c72 = arith.constant 72 : index
    %200 = vector.load %arg9[%c0_120, %c72] : memref<1x81xf32, #tpu.memory_space<vmem>>, vector<1x9xf32>
    tpu.vector_store %arg9[%c0_120, %c72], %199 {strides = array<i32>} : memref<1x81xf32, #tpu.memory_space<vmem>>, vector<1x9xf32>,
    return
  }
}

</mosaic_0001>

<llo_original>
// kernel: tpu_custom_call.1
$region0: #{tpu_custom_call.1}
  #allocation0 [shape = 'u32[]', space=smem, size = 0x4, offset = 0x4, fixed_abs, tag = 'smem constant byte address 0x4 - core index']
  #allocation1 [shape = 'u32[144,128]{1,0:T(1,128)}', space=vmem, size = 0x12000, scoped, tag = 'internal scratch']
  #allocation2 [shape = 'f32[9,128]{1,0:T(8,128)}', space=vmem, size = 0x2000, scoped, tag = 'scratch operand']
  %s0 = inlined_call_operand.vmem [shape: f32[1,81], index: 0, kind: input, shape index: {}]
  %s1 = inlined_call_operand.vmem [shape: f32[9,32], index: 1, kind: input, shape index: {}]
  %s2 = inlined_call_operand.vmem [shape: f32[1,32], index: 2, kind: input, shape index: {}]
  %s3 = inlined_call_operand.vmem [shape: f32[32,3], index: 3, kind: input, shape index: {}]
  %s4 = inlined_call_operand.vmem [shape: f32[1,3], index: 4, kind: input, shape index: {}]
  %s5 = inlined_call_operand.vmem [shape: f32[3,32], index: 5, kind: input, shape index: {}]
  %s6 = inlined_call_operand.vmem [shape: f32[1,32], index: 6, kind: input, shape index: {}]
  %s7 = inlined_call_operand.vmem [shape: f32[32,9], index: 7, kind: input, shape index: {}]
  %s8 = inlined_call_operand.vmem [shape: f32[1,9], index: 8, kind: input, shape index: {}]
  %s9 = inlined_call_operand.hbm [shape: f32[1,81], index: 9, kind: output, shape index: {}]
  %s10 = sld [smem:[#allocation0]]
  $region46: #{tpu_custom_call.1} parent=0
    _
  %s12 = ssub.s32 1, %s10
  %s13 = scalar_select 0, %s12, %s10
  $region1: #{tpu_custom_call.1} parent=0
    #allocation3 [shape = 'u8[512]{0}', space=vmem, size = 0x400, scoped, tag = 'output window, operand 0, single buffered']
    #allocation4 [shape = 's32[1]{0}', space=sflag, size = 0x4, scoped, tag = 'scoped memory for tpu_custom_call.1']
    %14 = vsyncpa [#allocation4], 0
    // Predicated region
    $region2: #{tpu_custom_call.1} parent=1 // pred_check
      _
    $region3: #{tpu_custom_call.1} parent=1 // pred_check_branch
      %16 = sbr.rel (0) target = $region5
    $region4: #{tpu_custom_call.1} parent=1 // pred_region
      _
    $region5: #{tpu_custom_call.1} parent=1 // pred_fallthru
      _
    // Predicated region
    $region6: #{tpu_custom_call.1} parent=1 // pred_check
      _
    $region7: #{tpu_custom_call.1} parent=1 // pred_check_branch
      %18 = sbr.rel (0) target = $region9
    $region8: #{tpu_custom_call.1} parent=1 // pred_region
      _
    $region9: #{tpu_custom_call.1} parent=1 // pred_fallthru
      _
    // Predicated region
    $region10: #{tpu_custom_call.1} parent=1 // pred_check
      _
    $region11: #{tpu_custom_call.1} parent=1 // pred_check_branch
      %20 = sbr.rel (0) target = $region13
    $region12: #{tpu_custom_call.1} parent=1 // pred_region
      _
    $region13: #{tpu_custom_call.1} parent=1 // pred_fallthru
      _
    // Predicated region
    $region14: #{tpu_custom_call.1} parent=1 // pred_check
      _
    $region15: #{tpu_custom_call.1} parent=1 // pred_check_branch
      %22 = sbr.rel (0) target = $region17
    $region16: #{tpu_custom_call.1} parent=1 // pred_region
      _
    $region17: #{tpu_custom_call.1} parent=1 // pred_fallthru
      _
    // Predicated region
    $region18: #{tpu_custom_call.1} parent=1 // pred_check
      _
    $region19: #{tpu_custom_call.1} parent=1 // pred_check_branch
      %24 = sbr.rel (0) target = $region21
    $region20: #{tpu_custom_call.1} parent=1 // pred_region
      _
    $region21: #{tpu_custom_call.1} parent=1 // pred_fallthru
      _
    // Predicated region
    $region22: #{tpu_custom_call.1} parent=1 // pred_check
      _
    $region23: #{tpu_custom_call.1} parent=1 // pred_check_branch
      %26 = sbr.rel (0) target = $region25
    $region24: #{tpu_custom_call.1} parent=1 // pred_region
      _
    $region25: #{tpu_custom_call.1} parent=1 // pred_fallthru
      _
    // Predicated region
    $region26: #{tpu_custom_call.1} parent=1 // pred_check
      _
    $region27: #{tpu_custom_call.1} parent=1 // pred_check_branch
      %28 = sbr.rel (0) target = $region29
    $region28: #{tpu_custom_call.1} parent=1 // pred_region
      _
    $region29: #{tpu_custom_call.1} parent=1 // pred_fallthru
      _
    // Predicated region
    $region30: #{tpu_custom_call.1} parent=1 // pred_check
      _
    $region31: #{tpu_custom_call.1} parent=1 // pred_check_branch
      %30 = sbr.rel (0) target = $region33
    $region32: #{tpu_custom_call.1} parent=1 // pred_region
      _
    $region33: #{tpu_custom_call.1} parent=1 // pred_fallthru
      _
    // Predicated region
    $region34: #{tpu_custom_call.1} parent=1 // pred_check
      _
    $region35: #{tpu_custom_call.1} parent=1 // pred_check_branch
      %32 = sbr.rel (0) target = $region37
    $region36: #{tpu_custom_call.1} parent=1 // pred_region
      _
    $region37: #{tpu_custom_call.1} parent=1 // pred_fallthru
      _
    %v33 = vld [vmem:[%s1] sm:$0xff]
    %v34 = vld [vmem:[%s1 + $0x8] sm:$0x1]
    %v35 = vld [vmem:[%s2] sm:$0x1]
    %v36 = vld [vmem:[%s3] sm:$0xff]
    %v37 = vld [vmem:[%s3 + $0x8] sm:$0xff]
    %v38 = vld [vmem:[%s3 + $0x10] sm:$0xff]
    %v39 = vld [vmem:[%s3 + $0x18] sm:$0xff]
    %v40 = vld [vmem:[%s4] sm:$0x1]
    %v41 = vld [vmem:[%s5] sm:$0x7]
    %v42 = vld [vmem:[%s6] sm:$0x1]
    %v43 = vld [vmem:[%s7] sm:$0xff]
    %v44 = vld [vmem:[%s7 + $0x8] sm:$0xff]
    %v45 = vld [vmem:[%s7 + $0x10] sm:$0xff]
    %v46 = vld [vmem:[%s7 + $0x18] sm:$0xff]
    %v47 = vld [vmem:[%s8] sm:$0x1]
    %v48 = vld [vmem:[%s0] sm:$0x1]
    %vm49 = vcmask 65536
    %50 = vst.msk [vmem:[#allocation2] sm:$0x1] %vm49, %v48
    %v52 = vlaneseq
    %v53 = vshrl.u32 %v52, 7
    %v54 = vsub.s32 0, %v53
    %v55 = vrot.slane %v48, %v54
    %56 = vrot.lane.b32.xlu0 %v55, 119
    %v57 = vpop.permute.xlu0 %56
    %59 = vst.msk [vmem:[#allocation2 + $0x1] sm:$0x1] %vm49, %v57
    %60 = vrot.lane.b32.xlu0 %v55, 110
    %v61 = vpop.permute.xlu0 %60
    %63 = vst.msk [vmem:[#allocation2 + $0x2] sm:$0x1] %vm49, %v61
    %64 = vrot.lane.b32.xlu0 %v55, 101
    %v65 = vpop.permute.xlu0 %64
    %67 = vst.msk [vmem:[#allocation2 + $0x3] sm:$0x1] %vm49, %v65
    %68 = vrot.lane.b32.xlu0 %v55, 92
    %v69 = vpop.permute.xlu0 %68
    %71 = vst.msk [vmem:[#allocation2 + $0x4] sm:$0x1] %vm49, %v69
    %72 = vrot.lane.b32.xlu0 %v55, 83
    %v73 = vpop.permute.xlu0 %72
    %75 = vst.msk [vmem:[#allocation2 + $0x5] sm:$0x1] %vm49, %v73
    %76 = vrot.lane.b32.xlu0 %v55, 74
    %v77 = vpop.permute.xlu0 %76
    %79 = vst.msk [vmem:[#allocation2 + $0x6] sm:$0x1] %vm49, %v77
    %80 = vrot.lane.b32.xlu0 %v55, 65
    %v81 = vpop.permute.xlu0 %80
    %83 = vst.msk [vmem:[#allocation2 + $0x7] sm:$0x1] %vm49, %v81
    %84 = vrot.lane.b32.xlu0 %v55, 56
    %v85 = vpop.permute.xlu0 %84
    %87 = vst.msk [vmem:[#allocation2 + $0x8] sm:$0x1] %vm49, %v85
    %v88 = vld [vmem:[#allocation2] sm:$0xff]
    %v89 = vld [vmem:[#allocation2 + $0x8] sm:$0x1]
    %v91 = vlaneseq
    %v92 = vshrl.u32 %v91, 7
    %v93 = vsub.s32 0, %v92
    %v94 = vrot.slane %v35, %v93
    %vm96 = vcmask 72704
    %v98 = vsel %vm96, %v88, 0
    %v101 = vsel %vm96, %v89, 0
    %vm103 = vcmask 1040384
    %v105 = vsel %vm103, %v34, 0
    %107 = vmatprep.subr.mxu0 0.0
    %108 = vmatpush1.msra.mxu0 %v33
    %109 = vmatprep.subr.mxu0 0.0
    %110 = vmatpush1.msra.mxu0 %v105
    %111 = vmatprep.subr.mxu0 0.0
    %112 = vmatpush1.msra.mxu0 0.0
    %113 = vmatprep.subr.mxu0 0.0
    %114 = vmatpush1.msra.mxu0 0.0
    %115 = vmatprep.subr.mxu0 0.0
    %116 = vmatpush1.msra.mxu0 0.0
    %117 = vmatprep.subr.mxu0 0.0
    %118 = vmatpush1.msra.mxu0 0.0
    %119 = vmatprep.subr.mxu0 0.0
    %120 = vmatpush1.msra.mxu0 0.0
    %121 = vmatprep.subr.mxu0 0.0
    %122 = vmatpush1.msra.mxu0 0.0
    %123 = vmatprep.subr.mxu0 0.0
    %124 = vmatpush1.msra.mxu0 0.0
    %125 = vmatprep.subr.mxu0 0.0
    %126 = vmatpush1.msra.mxu0 0.0
    %127 = vmatprep.subr.mxu0 0.0
    %128 = vmatpush1.msra.mxu0 0.0
    %129 = vmatprep.subr.mxu0 0.0
    %130 = vmatpush1.msra.mxu0 0.0
    %131 = vmatprep.subr.mxu0 0.0
    %132 = vmatpush1.msra.mxu0 0.0
    %133 = vmatprep.subr.mxu0 0.0
    %134 = vmatpush1.msra.mxu0 0.0
    %135 = vmatprep.subr.mxu0 0.0
    %136 = vmatpush1.msra.mxu0 0.0
    %137 = vmatprep.subr.mxu0 0.0
    %138 = vmatpush1.msra.mxu0 0.0
    %139 = vmatprep.subr.mxu0 0.0
    %140 = vmatpush1.msra.mxu0 0.0
    %141 = vmatprep.subr.mxu0 0.0
    %142 = vmatpush1.msra.mxu0 0.0
    %143 = vmatprep.subr.mxu0 0.0
    %144 = vmatpush1.msra.mxu0 0.0
    %145 = vmatprep.subr.mxu0 0.0
    %146 = vmatpush1.msra.mxu0 0.0
    %147 = vmatprep.subr.mxu0 0.0
    %148 = vmatpush1.msra.mxu0 0.0
    %149 = vmatprep.subr.mxu0 0.0
    %150 = vmatpush1.msra.mxu0 0.0
    %151 = vmatprep.subr.mxu0 0.0
    %152 = vmatpush1.msra.mxu0 0.0
    %153 = vmatprep.subr.mxu0 0.0
    %154 = vmatpush1.msra.mxu0 0.0
    %155 = vmatprep.subr.mxu0 0.0
    %156 = vmatpush1.msra.mxu0 0.0
    %157 = vmatprep.subr.mxu0 0.0
    %158 = vmatpush1.msra.mxu0 0.0
    %159 = vmatprep.subr.mxu0 0.0
    %160 = vmatpush1.msra.mxu0 0.0
    %161 = vmatprep.subr.mxu0 0.0
    %162 = vmatpush1.msra.mxu0 0.0
    %163 = vmatprep.subr.mxu0 0.0
    %164 = vmatpush1.msra.mxu0 0.0
    %165 = vmatprep.subr.mxu0 0.0
    %166 = vmatpush1.msra.mxu0 0.0
    %167 = vmatprep.subr.mxu0 0.0
    %168 = vmatpush1.msra.mxu0 0.0
    %169 = vmatprep.subr.mxu0 0.0
    %170 = vmatpush1.msra.mxu0 0.0
    %171 = vmatprep.mubr.f32.mxu0 0.0
    %172 = vmatmul.mubr.f32.gmra.mrb[0].mxu0 %v98
    %v173 = vpop.f32.mrb[0].mxu0
    %v174 = vadd.f32 %v94, %v173
    %v175 = vpop.f32.mrb[0].mxu0
    %176 = vmatprep.mubr.f32.mxu0 0.0
    %177 = vmatmul.mubr.f32.gmra.mrb[0].mxu0 %v101
    %v178 = vpop.f32.mrb[0].mxu0
    %v179 = vadd.f32 %v94, %v178
    %v180 = vpop.f32.mrb[0].mxu0
    %181 = vdwg.mxu0
    %v182 = vmax.f32 %v174, 0.0
    %v183 = vmax.f32 %v179, 0.0
    %v185 = vlaneseq
    %v186 = vshrl.u32 %v185, 7
    %v187 = vsub.s32 0, %v186
    %v188 = vrot.slane %v40, %v187
    %vm190 = vcmask 261120
    %v192 = vsel %vm190, %v182, 0
    %v195 = vsel %vm190, %v183, 0
    %197 = vmatprep.subr.mxu0 0.0
    %198 = vmatpush1.msra.mxu0 %v36
    %199 = vmatprep.subr.mxu0 0.0
    %200 = vmatpush1.msra.mxu0 %v37
    %201 = vmatprep.subr.mxu0 0.0
    %202 = vmatpush1.msra.mxu0 %v38
    %203 = vmatprep.subr.mxu0 0.0
    %204 = vmatpush1.msra.mxu0 %v39
    %205 = vmatprep.subr.mxu0 0.0
    %206 = vmatpush1.msra.mxu0 0.0
    %207 = vmatprep.subr.mxu0 0.0
    %208 = vmatpush1.msra.mxu0 0.0
    %209 = vmatprep.subr.mxu0 0.0
    %210 = vmatpush1.msra.mxu0 0.0
    %211 = vmatprep.subr.mxu0 0.0
    %212 = vmatpush1.msra.mxu0 0.0
    %213 = vmatprep.subr.mxu0 0.0
    %214 = vmatpush1.msra.mxu0 0.0
    %215 = vmatprep.subr.mxu0 0.0
    %216 = vmatpush1.msra.mxu0 0.0
    %217 = vmatprep.subr.mxu0 0.0
    %218 = vmatpush1.msra.mxu0 0.0
    %219 = vmatprep.subr.mxu0 0.0
    %220 = vmatpush1.msra.mxu0 0.0
    %221 = vmatprep.subr.mxu0 0.0
    %222 = vmatpush1.msra.mxu0 0.0
    %223 = vmatprep.subr.mxu0 0.0
    %224 = vmatpush1.msra.mxu0 0.0
    %225 = vmatprep.subr.mxu0 0.0
    %226 = vmatpush1.msra.mxu0 0.0
    %227 = vmatprep.subr.mxu0 0.0
    %228 = vmatpush1.msra.mxu0 0.0
    %229 = vmatprep.subr.mxu0 0.0
    %230 = vmatpush1.msra.mxu0 0.0
    %231 = vmatprep.subr.mxu0 0.0
    %232 = vmatpush1.msra.mxu0 0.0
    %233 = vmatprep.subr.mxu0 0.0
    %234 = vmatpush1.msra.mxu0 0.0
    %235 = vmatprep.subr.mxu0 0.0
    %236 = vmatpush1.msra.mxu0 0.0
    %237 = vmatprep.subr.mxu0 0.0
    %238 = vmatpush1.msra.mxu0 0.0
    %239 = vmatprep.subr.mxu0 0.0
    %240 = vmatpush1.msra.mxu0 0.0
    %241 = vmatprep.subr.mxu0 0.0
    %242 = vmatpush1.msra.mxu0 0.0
    %243 = vmatprep.subr.mxu0 0.0
    %244 = vmatpush1.msra.mxu0 0.0
    %245 = vmatprep.subr.mxu0 0.0
    %246 = vmatpush1.msra.mxu0 0.0
    %247 = vmatprep.subr.mxu0 0.0
    %248 = vmatpush1.msra.mxu0 0.0
    %249 = vmatprep.subr.mxu0 0.0
    %250 = vmatpush1.msra.mxu0 0.0
    %251 = vmatprep.subr.mxu0 0.0
    %252 = vmatpush1.msra.mxu0 0.0
    %253 = vmatprep.subr.mxu0 0.0
    %254 = vmatpush1.msra.mxu0 0.0
    %255 = vmatprep.subr.mxu0 0.0
    %256 = vmatpush1.msra.mxu0 0.0
    %257 = vmatprep.subr.mxu0 0.0
    %258 = vmatpush1.msra.mxu0 0.0
    %259 = vmatprep.subr.mxu0 0.0
    %260 = vmatpush1.msra.mxu0 0.0
    %261 = vmatprep.mubr.f32.mxu0 0.0
    %262 = vmatmul.mubr.f32.gmra.mrb[0].mxu0 %v192
    %v263 = vpop.f32.mrb[0].mxu0
    %v264 = vadd.f32 %v188, %v263
    %v265 = vpop.f32.mrb[0].mxu0
    %266 = vmatprep.mubr.f32.mxu0 0.0
    %267 = vmatmul.mubr.f32.gmra.mrb[0].mxu0 %v195
    %v268 = vpop.f32.mrb[0].mxu0
    %v269 = vadd.f32 %v188, %v268
    %v270 = vpop.f32.mrb[0].mxu0
    %271 = vdwg.mxu0
    %vm272 = vcmask 16384
    %273 = vst.msk [vmem:[#allocation2] sm:$0x1] %vm272, %v264
    %275 = vrot.lane.b32.xlu0 %v264, 3
    %v276 = vpop.permute.xlu0 %275
    %vm278 = vcmask 42009
    %279 = vst.msk [vmem:[#allocation2 - $0x1] sm:$0x2] %vm278, %v276
    %280 = vrot.lane.b32.xlu0 %v264, 6
    %v281 = vpop.permute.xlu0 %280
    %vm283 = vcmask 67634
    %284 = vst.msk [vmem:[#allocation2 - $0x2] sm:$0x4] %vm283, %v281
    %285 = vrot.lane.b32.xlu0 %v264, 9
    %v286 = vpop.permute.xlu0 %285
    %vm288 = vcmask 93259
    %289 = vst.msk [vmem:[#allocation2 - $0x3] sm:$0x8] %vm288, %v286
    %290 = vrot.lane.b32.xlu0 %v264, 12
    %v291 = vpop.permute.xlu0 %290
    %vm293 = vcmask 118884
    %294 = vst.msk [vmem:[#allocation2 - $0x4] sm:$0x10] %vm293, %v291
    %295 = vrot.lane.b32.xlu0 %v264, 15
    %v296 = vpop.permute.xlu0 %295
    %vm298 = vcmask 144509
    %299 = vst.msk [vmem:[#allocation2 - $0x5] sm:$0x20] %vm298, %v296
    %300 = vrot.lane.b32.xlu0 %v264, 18
    %v301 = vpop.permute.xlu0 %300
    %vm303 = vcmask 170134
    %304 = vst.msk [vmem:[#allocation2 - $0x6] sm:$0x40] %vm303, %v301
    %305 = vrot.lane.b32.xlu0 %v264, 21
    %v306 = vpop.permute.xlu0 %305
    %vm308 = vcmask 195759
    %309 = vst.msk [vmem:[#allocation2 - $0x7] sm:$0x80] %vm308, %v306
    %311 = vrot.lane.b32.xlu0 %v269, 24
    %v312 = vpop.permute.xlu0 %311
    %vm314 = vcmask 213184
    %315 = vst.msk [vmem:[#allocation2] sm:$0x1] %vm314, %v312
    %v316 = vld [vmem:[#allocation2] sm:$0x1]
    %317 = vst.msk [vmem:[#allocation2] sm:$0x1] %vm49, %v316
    %319 = vrot.lane.b32.xlu0 %v316, 119
    %v320 = vpop.permute.xlu0 %319
    %322 = vst.msk [vmem:[#allocation2 + $0x1] sm:$0x1] %vm49, %v320
    %323 = vrot.lane.b32.xlu0 %v316, 110
    %v324 = vpop.permute.xlu0 %323
    %326 = vst.msk [vmem:[#allocation2 + $0x2] sm:$0x1] %vm49, %v324
    %v327 = vld [vmem:[#allocation2] sm:$0x7]
    %v329 = vsel %vm96, %v327, 0
    %331 = vmatprep.subr.mxu0 0.0
    %332 = vmatpush1.msra.mxu0 %v33
    %333 = vmatprep.subr.mxu0 0.0
    %334 = vmatpush1.msra.mxu0 %v105
    %335 = vmatprep.subr.mxu0 0.0
    %336 = vmatpush1.msra.mxu0 0.0
    %337 = vmatprep.subr.mxu0 0.0
    %338 = vmatpush1.msra.mxu0 0.0
    %339 = vmatprep.subr.mxu0 0.0
    %340 = vmatpush1.msra.mxu0 0.0
    %341 = vmatprep.subr.mxu0 0.0
    %342 = vmatpush1.msra.mxu0 0.0
    %343 = vmatprep.subr.mxu0 0.0
    %344 = vmatpush1.msra.mxu0 0.0
    %345 = vmatprep.subr.mxu0 0.0
    %346 = vmatpush1.msra.mxu0 0.0
    %347 = vmatprep.subr.mxu0 0.0
    %348 = vmatpush1.msra.mxu0 0.0
    %349 = vmatprep.subr.mxu0 0.0
    %350 = vmatpush1.msra.mxu0 0.0
    %351 = vmatprep.subr.mxu0 0.0
    %352 = vmatpush1.msra.mxu0 0.0
    %353 = vmatprep.subr.mxu0 0.0
    %354 = vmatpush1.msra.mxu0 0.0
    %355 = vmatprep.subr.mxu0 0.0
    %356 = vmatpush1.msra.mxu0 0.0
    %357 = vmatprep.subr.mxu0 0.0
    %358 = vmatpush1.msra.mxu0 0.0
    %359 = vmatprep.subr.mxu0 0.0
    %360 = vmatpush1.msra.mxu0 0.0
    %361 = vmatprep.subr.mxu0 0.0
    %362 = vmatpush1.msra.mxu0 0.0
    %363 = vmatprep.subr.mxu0 0.0
    %364 = vmatpush1.msra.mxu0 0.0
    %365 = vmatprep.subr.mxu0 0.0
    %366 = vmatpush1.msra.mxu0 0.0
    %367 = vmatprep.subr.mxu0 0.0
    %368 = vmatpush1.msra.mxu0 0.0
    %369 = vmatprep.subr.mxu0 0.0
    %370 = vmatpush1.msra.mxu0 0.0
    %371 = vmatprep.subr.mxu0 0.0
    %372 = vmatpush1.msra.mxu0 0.0
    %373 = vmatprep.subr.mxu0 0.0
    %374 = vmatpush1.msra.mxu0 0.0
    %375 = vmatprep.subr.mxu0 0.0
    %376 = vmatpush1.msra.mxu0 0.0
    %377 = vmatprep.subr.mxu0 0.0
    %378 = vmatpush1.msra.mxu0 0.0
    %379 = vmatprep.subr.mxu0 0.0
    %380 = vmatpush1.msra.mxu0 0.0
    %381 = vmatprep.subr.mxu0 0.0
    %382 = vmatpush1.msra.mxu0 0.0
    %383 = vmatprep.subr.mxu0 0.0
    %384 = vmatpush1.msra.mxu0 0.0
    %385 = vmatprep.subr.mxu0 0.0
    %386 = vmatpush1.msra.mxu0 0.0
    %387 = vmatprep.subr.mxu0 0.0
    %388 = vmatpush1.msra.mxu0 0.0
    %389 = vmatprep.subr.mxu0 0.0
    %390 = vmatpush1.msra.mxu0 0.0
    %391 = vmatprep.subr.mxu0 0.0
    %392 = vmatpush1.msra.mxu0 0.0
    %393 = vmatprep.subr.mxu0 0.0
    %394 = vmatpush1.msra.mxu0 0.0
    %395 = vmatprep.mubr.f32.mxu0 0.0
    %396 = vmatmul.mubr.f32.gmra.mrb[0].mxu0 %v329
    %v397 = vpop.f32.mrb[0].mxu0
    %v398 = vadd.f32 %v94, %v397
    %v399 = vpop.f32.mrb[0].mxu0
    %400 = vdwg.mxu0
    %v401 = vmax.f32 %v398, 0.0
    %v403 = vsel %vm190, %v401, 0
    %405 = vmatprep.subr.mxu0 0.0
    %406 = vmatpush1.msra.mxu0 %v36
    %407 = vmatprep.subr.mxu0 0.0
    %408 = vmatpush1.msra.mxu0 %v37
    %409 = vmatprep.subr.mxu0 0.0
    %410 = vmatpush1.msra.mxu0 %v38
    %411 = vmatprep.subr.mxu0 0.0
    %412 = vmatpush1.msra.mxu0 %v39
    %413 = vmatprep.subr.mxu0 0.0
    %414 = vmatpush1.msra.mxu0 0.0
    %415 = vmatprep.subr.mxu0 0.0
    %416 = vmatpush1.msra.mxu0 0.0
    %417 = vmatprep.subr.mxu0 0.0
    %418 = vmatpush1.msra.mxu0 0.0
    %419 = vmatprep.subr.mxu0 0.0
    %420 = vmatpush1.msra.mxu0 0.0
    %421 = vmatprep.subr.mxu0 0.0
    %422 = vmatpush1.msra.mxu0 0.0
    %423 = vmatprep.subr.mxu0 0.0
    %424 = vmatpush1.msra.mxu0 0.0
    %425 = vmatprep.subr.mxu0 0.0
    %426 = vmatpush1.msra.mxu0 0.0
    %427 = vmatprep.subr.mxu0 0.0
    %428 = vmatpush1.msra.mxu0 0.0
    %429 = vmatprep.subr.mxu0 0.0
    %430 = vmatpush1.msra.mxu0 0.0
    %431 = vmatprep.subr.mxu0 0.0
    %432 = vmatpush1.msra.mxu0 0.0
    %433 = vmatprep.subr.mxu0 0.0
    %434 = vmatpush1.msra.mxu0 0.0
    %435 = vmatprep.subr.mxu0 0.0
    %436 = vmatpush1.msra.mxu0 0.0
    %437 = vmatprep.subr.mxu0 0.0
    %438 = vmatpush1.msra.mxu0 0.0
    %439 = vmatprep.subr.mxu0 0.0
    %440 = vmatpush1.msra.mxu0 0.0
    %441 = vmatprep.subr.mxu0 0.0
    %442 = vmatpush1.msra.mxu0 0.0
    %443 = vmatprep.subr.mxu0 0.0
    %444 = vmatpush1.msra.mxu0 0.0
    %445 = vmatprep.subr.mxu0 0.0
    %446 = vmatpush1.msra.mxu0 0.0
    %447 = vmatprep.subr.mxu0 0.0
    %448 = vmatpush1.msra.mxu0 0.0
    %449 = vmatprep.subr.mxu0 0.0
    %450 = vmatpush1.msra.mxu0 0.0
    %451 = vmatprep.subr.mxu0 0.0
    %452 = vmatpush1.msra.mxu0 0.0
    %453 = vmatprep.subr.mxu0 0.0
    %454 = vmatpush1.msra.mxu0 0.0
    %455 = vmatprep.subr.mxu0 0.0
    %456 = vmatpush1.msra.mxu0 0.0
    %457 = vmatprep.subr.mxu0 0.0
    %458 = vmatpush1.msra.mxu0 0.0
    %459 = vmatprep.subr.mxu0 0.0
    %460 = vmatpush1.msra.mxu0 0.0
    %461 = vmatprep.subr.mxu0 0.0
    %462 = vmatpush1.msra.mxu0 0.0
    %463 = vmatprep.subr.mxu0 0.0
    %464 = vmatpush1.msra.mxu0 0.0
    %465 = vmatprep.subr.mxu0 0.0
    %466 = vmatpush1.msra.mxu0 0.0
    %467 = vmatprep.subr.mxu0 0.0
    %468 = vmatpush1.msra.mxu0 0.0
    %469 = vmatprep.mubr.f32.mxu0 0.0
    %470 = vmatmul.mubr.f32.gmra.mrb[0].mxu0 %v403
    %v471 = vpop.f32.mrb[0].mxu0
    %v472 = vadd.f32 %v188, %v471
    %v473 = vpop.f32.mrb[0].mxu0
    %474 = vdwg.mxu0
    %475 = vst.msk [vmem:[#allocation2] sm:$0x1] %vm272, %v472
    %477 = vrot.lane.b32.xlu0 %v472, 3
    %v478 = vpop.permute.xlu0 %477
    %480 = vst.msk [vmem:[#allocation2 - $0x1] sm:$0x2] %vm278, %v478
    %481 = vrot.lane.b32.xlu0 %v472, 6
    %v482 = vpop.permute.xlu0 %481
    %484 = vst.msk [vmem:[#allocation2 - $0x2] sm:$0x4] %vm283, %v482
    %v485 = vld [vmem:[#allocation2] sm:$0x1]
    %v487 = vsel %vm96, %v485, 0
    %489 = vmatprep.subr.mxu0 0.0
    %490 = vmatpush1.msra.mxu0 %v33
    %491 = vmatprep.subr.mxu0 0.0
    %492 = vmatpush1.msra.mxu0 %v105
    %493 = vmatprep.subr.mxu0 0.0
    %494 = vmatpush1.msra.mxu0 0.0
    %495 = vmatprep.subr.mxu0 0.0
    %496 = vmatpush1.msra.mxu0 0.0
    %497 = vmatprep.subr.mxu0 0.0
    %498 = vmatpush1.msra.mxu0 0.0
    %499 = vmatprep.subr.mxu0 0.0
    %500 = vmatpush1.msra.mxu0 0.0
    %501 = vmatprep.subr.mxu0 0.0
    %502 = vmatpush1.msra.mxu0 0.0
    %503 = vmatprep.subr.mxu0 0.0
    %504 = vmatpush1.msra.mxu0 0.0
    %505 = vmatprep.subr.mxu0 0.0
    %506 = vmatpush1.msra.mxu0 0.0
    %507 = vmatprep.subr.mxu0 0.0
    %508 = vmatpush1.msra.mxu0 0.0
    %509 = vmatprep.subr.mxu0 0.0
    %510 = vmatpush1.msra.mxu0 0.0
    %511 = vmatprep.subr.mxu0 0.0
    %512 = vmatpush1.msra.mxu0 0.0
    %513 = vmatprep.subr.mxu0 0.0
    %514 = vmatpush1.msra.mxu0 0.0
    %515 = vmatprep.subr.mxu0 0.0
    %516 = vmatpush1.msra.mxu0 0.0
    %517 = vmatprep.subr.mxu0 0.0
    %518 = vmatpush1.msra.mxu0 0.0
    %519 = vmatprep.subr.mxu0 0.0
    %520 = vmatpush1.msra.mxu0 0.0
    %521 = vmatprep.subr.mxu0 0.0
    %522 = vmatpush1.msra.mxu0 0.0
    %523 = vmatprep.subr.mxu0 0.0
    %524 = vmatpush1.msra.mxu0 0.0
    %525 = vmatprep.subr.mxu0 0.0
    %526 = vmatpush1.msra.mxu0 0.0
    %527 = vmatprep.subr.mxu0 0.0
    %528 = vmatpush1.msra.mxu0 0.0
    %529 = vmatprep.subr.mxu0 0.0
    %530 = vmatpush1.msra.mxu0 0.0
    %531 = vmatprep.subr.mxu0 0.0
    %532 = vmatpush1.msra.mxu0 0.0
    %533 = vmatprep.subr.mxu0 0.0
    %534 = vmatpush1.msra.mxu0 0.0
    %535 = vmatprep.subr.mxu0 0.0
    %536 = vmatpush1.msra.mxu0 0.0
    %537 = vmatprep.subr.mxu0 0.0
    %538 = vmatpush1.msra.mxu0 0.0
    %539 = vmatprep.subr.mxu0 0.0
    %540 = vmatpush1.msra.mxu0 0.0
    %541 = vmatprep.subr.mxu0 0.0
    %542 = vmatpush1.msra.mxu0 0.0
    %543 = vmatprep.subr.mxu0 0.0
    %544 = vmatpush1.msra.mxu0 0.0
    %545 = vmatprep.subr.mxu0 0.0
    %546 = vmatpush1.msra.mxu0 0.0
    %547 = vmatprep.subr.mxu0 0.0
    %548 = vmatpush1.msra.mxu0 0.0
    %549 = vmatprep.subr.mxu0 0.0
    %550 = vmatpush1.msra.mxu0 0.0
    %551 = vmatprep.subr.mxu0 0.0
    %552 = vmatpush1.msra.mxu0 0.0
    %553 = vmatprep.mubr.f32.mxu0 0.0
    %554 = vmatmul.mubr.f32.gmra.mrb[0].mxu0 %v487
    %v555 = vpop.f32.mrb[0].mxu0
    %v556 = vadd.f32 %v35, %v555
    %v557 = vpop.f32.mrb[0].mxu0
    %558 = vdwg.mxu0
    %v559 = vmax.f32 %v556, 0.0
    %v561 = vsel %vm190, %v559, 0
    %563 = vmatprep.subr.mxu0 0.0
    %564 = vmatpush1.msra.mxu0 %v36
    %565 = vmatprep.subr.mxu0 0.0
    %566 = vmatpush1.msra.mxu0 %v37
    %567 = vmatprep.subr.mxu0 0.0
    %568 = vmatpush1.msra.mxu0 %v38
    %569 = vmatprep.subr.mxu0 0.0
    %570 = vmatpush1.msra.mxu0 %v39
    %571 = vmatprep.subr.mxu0 0.0
    %572 = vmatpush1.msra.mxu0 0.0
    %573 = vmatprep.subr.mxu0 0.0
    %574 = vmatpush1.msra.mxu0 0.0
    %575 = vmatprep.subr.mxu0 0.0
    %576 = vmatpush1.msra.mxu0 0.0
    %577 = vmatprep.subr.mxu0 0.0
    %578 = vmatpush1.msra.mxu0 0.0
    %579 = vmatprep.subr.mxu0 0.0
    %580 = vmatpush1.msra.mxu0 0.0
    %581 = vmatprep.subr.mxu0 0.0
    %582 = vmatpush1.msra.mxu0 0.0
    %583 = vmatprep.subr.mxu0 0.0
    %584 = vmatpush1.msra.mxu0 0.0
    %585 = vmatprep.subr.mxu0 0.0
    %586 = vmatpush1.msra.mxu0 0.0
    %587 = vmatprep.subr.mxu0 0.0
    %588 = vmatpush1.msra.mxu0 0.0
    %589 = vmatprep.subr.mxu0 0.0
    %590 = vmatpush1.msra.mxu0 0.0
    %591 = vmatprep.subr.mxu0 0.0
    %592 = vmatpush1.msra.mxu0 0.0
    %593 = vmatprep.subr.mxu0 0.0
    %594 = vmatpush1.msra.mxu0 0.0
    %595 = vmatprep.subr.mxu0 0.0
    %596 = vmatpush1.msra.mxu0 0.0
    %597 = vmatprep.subr.mxu0 0.0
    %598 = vmatpush1.msra.mxu0 0.0
    %599 = vmatprep.subr.mxu0 0.0
    %600 = vmatpush1.msra.mxu0 0.0
    %601 = vmatprep.subr.mxu0 0.0
    %602 = vmatpush1.msra.mxu0 0.0
    %603 = vmatprep.subr.mxu0 0.0
    %604 = vmatpush1.msra.mxu0 0.0
    %605 = vmatprep.subr.mxu0 0.0
    %606 = vmatpush1.msra.mxu0 0.0
    %607 = vmatprep.subr.mxu0 0.0
    %608 = vmatpush1.msra.mxu0 0.0
    %609 = vmatprep.subr.mxu0 0.0
    %610 = vmatpush1.msra.mxu0 0.0
    %611 = vmatprep.subr.mxu0 0.0
    %612 = vmatpush1.msra.mxu0 0.0
    %613 = vmatprep.subr.mxu0 0.0
    %614 = vmatpush1.msra.mxu0 0.0
    %615 = vmatprep.subr.mxu0 0.0
    %616 = vmatpush1.msra.mxu0 0.0
    %617 = vmatprep.subr.mxu0 0.0
    %618 = vmatpush1.msra.mxu0 0.0
    %619 = vmatprep.subr.mxu0 0.0
    %620 = vmatpush1.msra.mxu0 0.0
    %621 = vmatprep.subr.mxu0 0.0
    %622 = vmatpush1.msra.mxu0 0.0
    %623 = vmatprep.subr.mxu0 0.0
    %624 = vmatpush1.msra.mxu0 0.0
    %625 = vmatprep.subr.mxu0 0.0
    %626 = vmatpush1.msra.mxu0 0.0
    %627 = vmatprep.mubr.f32.mxu0 0.0
    %628 = vmatmul.mubr.f32.gmra.mrb[0].mxu0 %v561
    %v629 = vpop.f32.mrb[0].mxu0
    %v630 = vadd.f32 %v40, %v629
    %v631 = vpop.f32.mrb[0].mxu0
    %632 = vdwg.mxu0
    %634 = vset.pattern.permute.xlu0 0
    %635 = vperm.xlu0 %634, %v630
    %v636 = vpop.permute.xlu0 %635
    %v638 = vmul.f32 %v636, %v41
    %639 = vset.pattern.permute.xlu0 1
    %640 = vperm.xlu0 %639, %v630
    %v641 = vpop.permute.xlu0 %640
    %v644 = vrot.slane %v41, 1
    %v646 = vmul.f32 %v641, %v644
    %v647 = vadd.f32 %v638, %v646
    %648 = vset.pattern.permute.xlu0 2
    %649 = vperm.xlu0 %648, %v630
    %v650 = vpop.permute.xlu0 %649
    %v652 = vrot.slane %v41, 2
    %v654 = vmul.f32 %v650, %v652
    %v655 = vadd.f32 %v647, %v654
    %v656 = vadd.f32 %v655, %v42
    %v657 = vmax.f32 %v656, 0.0
    %v659 = vsel %vm190, %v657, 0
    %661 = vmatprep.subr.mxu0 0.0
    %662 = vmatpush1.msra.mxu0 %v43
    %663 = vmatprep.subr.mxu0 0.0
    %664 = vmatpush1.msra.mxu0 %v44
    %665 = vmatprep.subr.mxu0 0.0
    %666 = vmatpush1.msra.mxu0 %v45
    %667 = vmatprep.subr.mxu0 0.0
    %668 = vmatpush1.msra.mxu0 %v46
    %669 = vmatprep.subr.mxu0 0.0
    %670 = vmatpush1.msra.mxu0 0.0
    %671 = vmatprep.subr.mxu0 0.0
    %672 = vmatpush1.msra.mxu0 0.0
    %673 = vmatprep.subr.mxu0 0.0
    %674 = vmatpush1.msra.mxu0 0.0
    %675 = vmatprep.subr.mxu0 0.0
    %676 = vmatpush1.msra.mxu0 0.0
    %677 = vmatprep.subr.mxu0 0.0
    %678 = vmatpush1.msra.mxu0 0.0
    %679 = vmatprep.subr.mxu0 0.0
    %680 = vmatpush1.msra.mxu0 0.0
    %681 = vmatprep.subr.mxu0 0.0
    %682 = vmatpush1.msra.mxu0 0.0
    %683 = vmatprep.subr.mxu0 0.0
    %684 = vmatpush1.msra.mxu0 0.0
    %685 = vmatprep.subr.mxu0 0.0
    %686 = vmatpush1.msra.mxu0 0.0
    %687 = vmatprep.subr.mxu0 0.0
    %688 = vmatpush1.msra.mxu0 0.0
    %689 = vmatprep.subr.mxu0 0.0
    %690 = vmatpush1.msra.mxu0 0.0
    %691 = vmatprep.subr.mxu0 0.0
    %692 = vmatpush1.msra.mxu0 0.0
    %693 = vmatprep.subr.mxu0 0.0
    %694 = vmatpush1.msra.mxu0 0.0
    %695 = vmatprep.subr.mxu0 0.0
    %696 = vmatpush1.msra.mxu0 0.0
    %697 = vmatprep.subr.mxu0 0.0
    %698 = vmatpush1.msra.mxu0 0.0
    %699 = vmatprep.subr.mxu0 0.0
    %700 = vmatpush1.msra.mxu0 0.0
    %701 = vmatprep.subr.mxu0 0.0
    %702 = vmatpush1.msra.mxu0 0.0
    %703 = vmatprep.subr.mxu0 0.0
    %704 = vmatpush1.msra.mxu0 0.0
    %705 = vmatprep.subr.mxu0 0.0
    %706 = vmatpush1.msra.mxu0 0.0
    %707 = vmatprep.subr.mxu0 0.0
    %708 = vmatpush1.msra.mxu0 0.0
    %709 = vmatprep.subr.mxu0 0.0
    %710 = vmatpush1.msra.mxu0 0.0
    %711 = vmatprep.subr.mxu0 0.0
    %712 = vmatpush1.msra.mxu0 0.0
    %713 = vmatprep.subr.mxu0 0.0
    %714 = vmatpush1.msra.mxu0 0.0
    %715 = vmatprep.subr.mxu0 0.0
    %716 = vmatpush1.msra.mxu0 0.0
    %717 = vmatprep.subr.mxu0 0.0
    %718 = vmatpush1.msra.mxu0 0.0
    %719 = vmatprep.subr.mxu0 0.0
    %720 = vmatpush1.msra.mxu0 0.0
    %721 = vmatprep.subr.mxu0 0.0
    %722 = vmatpush1.msra.mxu0 0.0
    %723 = vmatprep.subr.mxu0 0.0
    %724 = vmatpush1.msra.mxu0 0.0
    %725 = vmatprep.mubr.f32.mxu0 0.0
    %726 = vmatmul.mubr.f32.gmra.mrb[0].mxu0 %v659
    %v727 = vpop.f32.mrb[0].mxu0
    %v728 = vadd.f32 %v47, %v727
    %v729 = vpop.f32.mrb[0].mxu0
    %730 = vdwg.mxu0
    %731 = vst.msk [vmem:[#allocation2] sm:$0x1] %vm272, %v728
    %733 = vrot.lane.b32.xlu0 %v728, 125
    %v734 = vpop.permute.xlu0 %733
    %736 = vst.msk [vmem:[#allocation2 + $0x1] sm:$0x1] %vm272, %v734
    %737 = vrot.lane.b32.xlu0 %v728, 122
    %v738 = vpop.permute.xlu0 %737
    %740 = vst.msk [vmem:[#allocation2 + $0x2] sm:$0x1] %vm272, %v738
    %v741 = vld [vmem:[#allocation2] sm:$0x7]
    %743 = vset.pattern.permute.xlu0 0
    %744 = vperm.xlu0 %743, %v741
    %v745 = vpop.permute.xlu0 %744
    %v747 = vlaneseq
    %v748 = vshrl.u32 %v747, 7
    %v749 = vsub.s32 0, %v748
    %v750 = vrot.slane %v41, %v749
    %v751 = vmul.f32 %v745, %v750
    %752 = vset.pattern.permute.xlu0 1
    %753 = vperm.xlu0 %752, %v741
    %v754 = vpop.permute.xlu0 %753
    %v756 = vlaneseq
    %v757 = vshrl.u32 %v756, 7
    %v758 = vsub.s32 1, %v757
    %v759 = vrot.slane %v41, %v758
    %v760 = vmul.f32 %v754, %v759
    %v761 = vadd.f32 %v751, %v760
    %762 = vset.pattern.permute.xlu0 2
    %763 = vperm.xlu0 %762, %v741
    %v764 = vpop.permute.xlu0 %763
    %v766 = vlaneseq
    %v767 = vshrl.u32 %v766, 7
    %v768 = vsub.s32 2, %v767
    %v769 = vrot.slane %v41, %v768
    %v770 = vmul.f32 %v764, %v769
    %v771 = vadd.f32 %v761, %v770
    %v773 = vlaneseq
    %v774 = vshrl.u32 %v773, 7
    %v775 = vsub.s32 0, %v774
    %v776 = vrot.slane %v42, %v775
    %v778 = vadd.f32 %v771, %v776
    %v779 = vmax.f32 %v778, 0.0
    %v781 = vlaneseq
    %v782 = vshrl.u32 %v781, 7
    %v783 = vsub.s32 0, %v782
    %v784 = vrot.slane %v47, %v783
    %v787 = vsel %vm190, %v779, 0
    %789 = vmatprep.subr.mxu0 0.0
    %790 = vmatpush1.msra.mxu0 %v43
    %791 = vmatprep.subr.mxu0 0.0
    %792 = vmatpush1.msra.mxu0 %v44
    %793 = vmatprep.subr.mxu0 0.0
    %794 = vmatpush1.msra.mxu0 %v45
    %795 = vmatprep.subr.mxu0 0.0
    %796 = vmatpush1.msra.mxu0 %v46
    %797 = vmatprep.subr.mxu0 0.0
    %798 = vmatpush1.msra.mxu0 0.0
    %799 = vmatprep.subr.mxu0 0.0
    %800 = vmatpush1.msra.mxu0 0.0
    %801 = vmatprep.subr.mxu0 0.0
    %802 = vmatpush1.msra.mxu0 0.0
    %803 = vmatprep.subr.mxu0 0.0
    %804 = vmatpush1.msra.mxu0 0.0
    %805 = vmatprep.subr.mxu0 0.0
    %806 = vmatpush1.msra.mxu0 0.0
    %807 = vmatprep.subr.mxu0 0.0
    %808 = vmatpush1.msra.mxu0 0.0
    %809 = vmatprep.subr.mxu0 0.0
    %810 = vmatpush1.msra.mxu0 0.0
    %811 = vmatprep.subr.mxu0 0.0
    %812 = vmatpush1.msra.mxu0 0.0
    %813 = vmatprep.subr.mxu0 0.0
    %814 = vmatpush1.msra.mxu0 0.0
    %815 = vmatprep.subr.mxu0 0.0
    %816 = vmatpush1.msra.mxu0 0.0
    %817 = vmatprep.subr.mxu0 0.0
    %818 = vmatpush1.msra.mxu0 0.0
    %819 = vmatprep.subr.mxu0 0.0
    %820 = vmatpush1.msra.mxu0 0.0
    %821 = vmatprep.subr.mxu0 0.0
    %822 = vmatpush1.msra.mxu0 0.0
    %823 = vmatprep.subr.mxu0 0.0
    %824 = vmatpush1.msra.mxu0 0.0
    %825 = vmatprep.subr.mxu0 0.0
    %826 = vmatpush1.msra.mxu0 0.0
    %827 = vmatprep.subr.mxu0 0.0
    %828 = vmatpush1.msra.mxu0 0.0
    %829 = vmatprep.subr.mxu0 0.0
    %830 = vmatpush1.msra.mxu0 0.0
    %831 = vmatprep.subr.mxu0 0.0
    %832 = vmatpush1.msra.mxu0 0.0
    %833 = vmatprep.subr.mxu0 0.0
    %834 = vmatpush1.msra.mxu0 0.0
    %835 = vmatprep.subr.mxu0 0.0
    %836 = vmatpush1.msra.mxu0 0.0
    %837 = vmatprep.subr.mxu0 0.0
    %838 = vmatpush1.msra.mxu0 0.0
    %839 = vmatprep.subr.mxu0 0.0
    %840 = vmatpush1.msra.mxu0 0.0
    %841 = vmatprep.subr.mxu0 0.0
    %842 = vmatpush1.msra.mxu0 0.0
    %843 = vmatprep.subr.mxu0 0.0
    %844 = vmatpush1.msra.mxu0 0.0
    %845 = vmatprep.subr.mxu0 0.0
    %846 = vmatpush1.msra.mxu0 0.0
    %847 = vmatprep.subr.mxu0 0.0
    %848 = vmatpush1.msra.mxu0 0.0
    %849 = vmatprep.subr.mxu0 0.0
    %850 = vmatpush1.msra.mxu0 0.0
    %851 = vmatprep.subr.mxu0 0.0
    %852 = vmatpush1.msra.mxu0 0.0
    %853 = vmatprep.mubr.f32.mxu0 0.0
    %854 = vmatmul.mubr.f32.gmra.mrb[0].mxu0 %v787
    %v855 = vpop.f32.mrb[0].mxu0
    %v856 = vadd.f32 %v784, %v855
    %v857 = vpop.f32.mrb[0].mxu0
    %858 = vdwg.mxu0
    %859 = vst.msk [vmem:[#allocation2] sm:$0x1] %vm49, %v856
    %861 = vrot.lane.b32.xlu0 %v856, 9
    %v862 = vpop.permute.xlu0 %861
    %vm864 = vcmask 140361
    %865 = vst.msk [vmem:[#allocation2 - $0x1] sm:$0x2] %vm864, %v862
    %866 = vrot.lane.b32.xlu0 %v856, 18
    %v867 = vpop.permute.xlu0 %866
    %vm869 = vcmask 215186
    %870 = vst.msk [vmem:[#allocation2 - $0x2] sm:$0x4] %vm869, %v867
    %v871 = vld [vmem:[#allocation2] sm:$0x1]
    %872 = vst.msk [vmem:[#allocation2] sm:$0x1] %vm272, %v871
    %874 = vrot.lane.b32.xlu0 %v871, 125
    %v875 = vpop.permute.xlu0 %874
    %877 = vst.msk [vmem:[#allocation2 + $0x1] sm:$0x1] %vm272, %v875
    %878 = vrot.lane.b32.xlu0 %v871, 122
    %v879 = vpop.permute.xlu0 %878
    %881 = vst.msk [vmem:[#allocation2 + $0x2] sm:$0x1] %vm272, %v879
    %882 = vrot.lane.b32.xlu0 %v871, 119
    %v883 = vpop.permute.xlu0 %882
    %885 = vst.msk [vmem:[#allocation2 + $0x3] sm:$0x1] %vm272, %v883
    %886 = vrot.lane.b32.xlu0 %v871, 116
    %v887 = vpop.permute.xlu0 %886
    %889 = vst.msk [vmem:[#allocation2 + $0x4] sm:$0x1] %vm272, %v887
    %890 = vrot.lane.b32.xlu0 %v871, 113
    %v891 = vpop.permute.xlu0 %890
    %893 = vst.msk [vmem:[#allocation2 + $0x5] sm:$0x1] %vm272, %v891
    %894 = vrot.lane.b32.xlu0 %v871, 110
    %v895 = vpop.permute.xlu0 %894
    %897 = vst.msk [vmem:[#allocation2 + $0x6] sm:$0x1] %vm272, %v895
    %898 = vrot.lane.b32.xlu0 %v871, 107
    %v899 = vpop.permute.xlu0 %898
    %901 = vst.msk [vmem:[#allocation2 + $0x7] sm:$0x1] %vm272, %v899
    %902 = vrot.lane.b32.xlu0 %v871, 104
    %v903 = vpop.permute.xlu0 %902
    %905 = vst.msk [vmem:[#allocation2 + $0x8] sm:$0x1] %vm272, %v903
    %v906 = vld [vmem:[#allocation2] sm:$0xff]
    %v907 = vld [vmem:[#allocation2 + $0x8] sm:$0x1]
    %909 = vset.pattern.permute.xlu0 0
    %910 = vperm.xlu0 %909, %v906
    %v911 = vpop.permute.xlu0 %910
    %914 = vset.pattern.permute.xlu0 0
    %915 = vperm.xlu0 %914, %v907
    %v916 = vpop.permute.xlu0 %915
    %v918 = vmul.f32 %v911, %v750
    %v919 = vmul.f32 %v916, %v750
    %920 = vset.pattern.permute.xlu0 1
    %921 = vperm.xlu0 %920, %v906
    %v922 = vpop.permute.xlu0 %921
    %924 = vset.pattern.permute.xlu0 1
    %925 = vperm.xlu0 %924, %v907
    %v926 = vpop.permute.xlu0 %925
    %v928 = vmul.f32 %v922, %v759
    %v929 = vmul.f32 %v926, %v759
    %v930 = vadd.f32 %v918, %v928
    %v931 = vadd.f32 %v919, %v929
    %932 = vset.pattern.permute.xlu0 2
    %933 = vperm.xlu0 %932, %v906
    %v934 = vpop.permute.xlu0 %933
    %936 = vset.pattern.permute.xlu0 2
    %937 = vperm.xlu0 %936, %v907
    %v938 = vpop.permute.xlu0 %937
    %v940 = vmul.f32 %v934, %v769
    %v941 = vmul.f32 %v938, %v769
    %v942 = vadd.f32 %v930, %v940
    %v943 = vadd.f32 %v931, %v941
    %v944 = vadd.f32 %v942, %v776
    %v945 = vadd.f32 %v943, %v776
    %v946 = vmax.f32 %v944, 0.0
    %v947 = vmax.f32 %v945, 0.0
    %v949 = vsel %vm190, %v946, 0
    %v952 = vsel %vm190, %v947, 0
    %954 = vmatprep.subr.mxu0 0.0
    %955 = vmatpush1.msra.mxu0 %v43
    %956 = vmatprep.subr.mxu0 0.0
    %957 = vmatpush1.msra.mxu0 %v44
    %958 = vmatprep.subr.mxu0 0.0
    %959 = vmatpush1.msra.mxu0 %v45
    %960 = vmatprep.subr.mxu0 0.0
    %961 = vmatpush1.msra.mxu0 %v46
    %962 = vmatprep.subr.mxu0 0.0
    %963 = vmatpush1.msra.mxu0 0.0
    %964 = vmatprep.subr.mxu0 0.0
    %965 = vmatpush1.msra.mxu0 0.0
    %966 = vmatprep.subr.mxu0 0.0
    %967 = vmatpush1.msra.mxu0 0.0
    %968 = vmatprep.subr.mxu0 0.0
    %969 = vmatpush1.msra.mxu0 0.0
    %970 = vmatprep.subr.mxu0 0.0
    %971 = vmatpush1.msra.mxu0 0.0
    %972 = vmatprep.subr.mxu0 0.0
    %973 = vmatpush1.msra.mxu0 0.0
    %974 = vmatprep.subr.mxu0 0.0
    %975 = vmatpush1.msra.mxu0 0.0
    %976 = vmatprep.subr.mxu0 0.0
    %977 = vmatpush1.msra.mxu0 0.0
    %978 = vmatprep.subr.mxu0 0.0
    %979 = vmatpush1.msra.mxu0 0.0
    %980 = vmatprep.subr.mxu0 0.0
    %981 = vmatpush1.msra.mxu0 0.0
    %982 = vmatprep.subr.mxu0 0.0
    %983 = vmatpush1.msra.mxu0 0.0
    %984 = vmatprep.subr.mxu0 0.0
    %985 = vmatpush1.msra.mxu0 0.0
    %986 = vmatprep.subr.mxu0 0.0
    %987 = vmatpush1.msra.mxu0 0.0
    %988 = vmatprep.subr.mxu0 0.0
    %989 = vmatpush1.msra.mxu0 0.0
    %990 = vmatprep.subr.mxu0 0.0
    %991 = vmatpush1.msra.mxu0 0.0
    %992 = vmatprep.subr.mxu0 0.0
    %993 = vmatpush1.msra.mxu0 0.0
    %994 = vmatprep.subr.mxu0 0.0
    %995 = vmatpush1.msra.mxu0 0.0
    %996 = vmatprep.subr.mxu0 0.0
    %997 = vmatpush1.msra.mxu0 0.0
    %998 = vmatprep.subr.mxu0 0.0
    %999 = vmatpush1.msra.mxu0 0.0
    %1000 = vmatprep.subr.mxu0 0.0
    %1001 = vmatpush1.msra.mxu0 0.0
    %1002 = vmatprep.subr.mxu0 0.0
    %1003 = vmatpush1.msra.mxu0 0.0
    %1004 = vmatprep.subr.mxu0 0.0
    %1005 = vmatpush1.msra.mxu0 0.0
    %1006 = vmatprep.subr.mxu0 0.0
    %1007 = vmatpush1.msra.mxu0 0.0
    %1008 = vmatprep.subr.mxu0 0.0
    %1009 = vmatpush1.msra.mxu0 0.0
    %1010 = vmatprep.subr.mxu0 0.0
    %1011 = vmatpush1.msra.mxu0 0.0
    %1012 = vmatprep.subr.mxu0 0.0
    %1013 = vmatpush1.msra.mxu0 0.0
    %1014 = vmatprep.subr.mxu0 0.0
    %1015 = vmatpush1.msra.mxu0 0.0
    %1016 = vmatprep.subr.mxu0 0.0
    %1017 = vmatpush1.msra.mxu0 0.0
    %1018 = vmatprep.mubr.f32.mxu0 0.0
    %1019 = vmatmul.mubr.f32.gmra.mrb[0].mxu0 %v949
    %v1020 = vpop.f32.mrb[0].mxu0
    %v1021 = vadd.f32 %v784, %v1020
    %v1022 = vpop.f32.mrb[0].mxu0
    %1023 = vmatprep.mubr.f32.mxu0 0.0
    %1024 = vmatmul.mubr.f32.gmra.mrb[0].mxu0 %v952
    %v1025 = vpop.f32.mrb[0].mxu0
    %v1026 = vadd.f32 %v784, %v1025
    %v1027 = vpop.f32.mrb[0].mxu0
    %1028 = vdwg.mxu0
    %1029 = vst.msk [vmem:[#allocation3] sm:$0x1] %vm49, %v1021
    %1031 = vrot.lane.b32.xlu0 %v1021, 9
    %v1032 = vpop.permute.xlu0 %1031
    %1034 = vst.msk [vmem:[#allocation3 - $0x1] sm:$0x2] %vm864, %v1032
    %1035 = vrot.lane.b32.xlu0 %v1021, 18
    %v1036 = vpop.permute.xlu0 %1035
    %1038 = vst.msk [vmem:[#allocation3 - $0x2] sm:$0x4] %vm869, %v1036
    %1039 = vrot.lane.b32.xlu0 %v1021, 27
    %v1040 = vpop.permute.xlu0 %1039
    %vm1042 = vcmask 290011
    %1043 = vst.msk [vmem:[#allocation3 - $0x3] sm:$0x8] %vm1042, %v1040
    %1044 = vrot.lane.b32.xlu0 %v1021, 36
    %v1045 = vpop.permute.xlu0 %1044
    %vm1047 = vcmask 364836
    %1048 = vst.msk [vmem:[#allocation3 - $0x4] sm:$0x10] %vm1047, %v1045
    %1049 = vrot.lane.b32.xlu0 %v1021, 45
    %v1050 = vpop.permute.xlu0 %1049
    %vm1052 = vcmask 439661
    %1053 = vst.msk [vmem:[#allocation3 - $0x5] sm:$0x20] %vm1052, %v1050
    %1054 = vrot.lane.b32.xlu0 %v1021, 54
    %v1055 = vpop.permute.xlu0 %1054
    %vm1057 = vcmask 514486
    %1058 = vst.msk [vmem:[#allocation3 - $0x6] sm:$0x40] %vm1057, %v1055
    %1059 = vrot.lane.b32.xlu0 %v1021, 63
    %v1060 = vpop.permute.xlu0 %1059
    %vm1062 = vcmask 589311
    %1063 = vst.msk [vmem:[#allocation3 - $0x7] sm:$0x80] %vm1062, %v1060
    %1065 = vrot.lane.b32.xlu0 %v1026, 72
    %v1066 = vpop.permute.xlu0 %1065
    %vm1068 = vcmask 655936
    %1069 = vst.msk [vmem:[#allocation3] sm:$0x1] %vm1068, %v1066
    // Predicated region
    $region38: #{tpu_custom_call.1} parent=1 // pred_check
      _
    $region39: #{tpu_custom_call.1} parent=1 // pred_check_branch
      %1071 = sbr.rel (0) target = $region41
    $region40: #{tpu_custom_call.1} parent=1 // pred_region
      %s1073 = ssub.s32 16, 16
      %1074 = vsyncadd [#allocation4], %s1073
      %s1076 = sshll.u32 [#allocation3], 4
      %s1077 = int_to_ptr.vmem [resolvable:$true] %s1076
      %1079 = dma.vmem_to_hbm [thread:$0]  %s1077, 16, %s9, [#allocation4]
    $region41: #{tpu_custom_call.1} parent=1 // pred_fallthru
      _
    // Predicated region
    $region42: #{tpu_custom_call.1} parent=1 // pred_check
      _
    $region43: #{tpu_custom_call.1} parent=1 // pred_check_branch
      %1081 = sbr.rel (0) target = $region45
    $region44: #{tpu_custom_call.1} parent=1 // pred_region
      %1082 = dma.done [#allocation4], 16
    $region45: #{tpu_custom_call.1} parent=1 // pred_fallthru
      _
    %1083 = vsyncpa [#allocation4], 1

</llo_original>
